<compile_context>
chip_gen: v7x
topology: tpu7x:2x2x1
jax: 0.10.0
libtpu: 0.0.40
codegen_flags: <defaults>
</compile_context>

<pallas_src>
import jax
import jax.numpy as jnp
from jax import lax
from jax.experimental import pallas as pl
from jax.experimental.pallas import tpu as pltpu

# ---- config: Vpnn(inp_size=128, outp_size=16, hidden_layers=2,
#                   diagonal_M=0.01, chebyshev_M=2, rotations=3, svd_u=False)
INP_SIZE = 128
OUTP_SIZE = 16
HIDDEN_LAYERS = 2
DIAG_M = 0.01
CHEB_M = 2
ROTATIONS = 3
N_ROT = HIDDEN_LAYERS * 2 * ROTATIONS

BATCH = 512          # example batch; grid over batch amortizes weight DMA
TILE_B = 256         # rows per grid step (multiple of 8, fills MXU rows)


def _chebyshev_T(x, M):
    # T_M(x) via the standard recurrence (static M); equals cos(M*arccos(x))
    # on [-1, 1] but avoids transcendental lowering inside the kernel.
    if M == 0:
        return jnp.ones_like(x)
    t_prev, t_cur = jnp.ones_like(x), x
    for _ in range(M - 1):
        t_prev, t_cur = t_cur, 2.0 * x * t_cur - t_prev
    return t_cur


def vpnn_kernel(x_ref, lm_ref, bias_ref, w_ref, b_ref, o_ref):
    x = x_ref[...]                                   # (TILE_B, N) f32
    n = x.shape[-1]
    half = n // 2
    second_half = lax.broadcasted_iota(jnp.int32, x.shape, 1) >= half

    for h in range(HIDDEN_LAYERS):
        # fused (3 rotations + volume-preserving diagonal + 3 rotations) as a
        # single bf16 MXU matmul against the precomposed layer matrix.
        x = jnp.dot(x.astype(jnp.bfloat16), lm_ref[h],
                    preferred_element_type=jnp.float32)
        # bias (f32 VPU)
        x = x + bias_ref[pl.ds(h, 1), :]
        # coupled Chebyshev activation (volume preserving additive coupling):
        #   y[:, :half] = x[:, :half]
        #   y[:, half:] = x[:, half:] + T_M(clip(x[:, :half], -1, 1))
        # shift == n/2, so roll direction is symmetric (first half -> second-
        # half lanes); re-verify direction if INP_SIZE handling ever changes.
        rolled = pltpu.roll(x, shift=half, axis=1)
        t = _chebyshev_T(jnp.clip(rolled, -1.0, 1.0), CHEB_M)
        x = x + jnp.where(second_half, t, 0.0)

    # final Linear, W zero-padded to (N, N) for a lane-dense 128-wide store.
    y = jnp.dot(x.astype(jnp.bfloat16), w_ref[...],
                preferred_element_type=jnp.float32) + b_ref[...]
    o_ref[...] = y.astype(o_ref.dtype)


@jax.jit
def vpnn_forward(x, layer_mats, bias, w_pad, b_pad):
    batch, n = x.shape
    grid = (batch // TILE_B,)
    flops = 2 * batch * n * n * (HIDDEN_LAYERS + 1)
    bytes_accessed = (x.size * 4 + batch * n * 4 + layer_mats.size * 2
                      + bias.size * 4 + w_pad.size * 2 + b_pad.size * 4)
    out_full = pl.pallas_call(
        vpnn_kernel,
        out_shape=jax.ShapeDtypeStruct((batch, n), jnp.float32),
        grid_spec=pltpu.PrefetchScalarGridSpec(
            num_scalar_prefetch=0,
            grid=grid,
            in_specs=[
                pl.BlockSpec((TILE_B, n), lambda i: (i, 0)),              # x
                pl.BlockSpec((HIDDEN_LAYERS, n, n), lambda i: (0, 0, 0)),  # layer mats (bf16)
                pl.BlockSpec((HIDDEN_LAYERS, n), lambda i: (0, 0)),        # bias
                pl.BlockSpec((n, n), lambda i: (0, 0)),                    # W padded (bf16)
                pl.BlockSpec((1, n), lambda i: (0, 0)),                    # b padded
            ],
            out_specs=pl.BlockSpec((TILE_B, n), lambda i: (i, 0)),
        ),
        compiler_params=pltpu.CompilerParams(
            dimension_semantics=("parallel",)),
        cost_estimate=pl.CostEstimate(flops=flops, transcendentals=0,
                                      bytes_accessed=bytes_accessed),
    )(x, layer_mats, bias, w_pad, b_pad)
    return out_full[:, :OUTP_SIZE]


# ---------------- parameter construction (plain-JAX glue) ----------------
def make_rotation_matrix(key, n):
    """Dense matrix M such that x @ M == Rotational(n)(x):
       permute features, then rotate consecutive pairs by learnable angles."""
    kp, kt = jax.random.split(key)
    perm = jax.random.permutation(kp, n)
    theta = jax.random.uniform(kt, (n // 2,), minval=0.0, maxval=2.0 * jnp.pi)
    c, s = jnp.cos(theta), jnp.sin(theta)
    idx = jnp.arange(n // 2)
    B = jnp.zeros((n, n), jnp.float32)
    B = B.at[2 * idx, 2 * idx].set(c)
    B = B.at[2 * idx + 1, 2 * idx].set(-s)
    B = B.at[2 * idx, 2 * idx + 1].set(s)
    B = B.at[2 * idx + 1, 2 * idx + 1].set(c)
    P = jax.nn.one_hot(perm, n, dtype=jnp.float32).T  # (x @ P)[j] = x[perm[j]]
    return P @ B


def prepare_params(rots, diag, bias, w, b):
    """Precompose each hidden layer's 6 rotations + diagonal into one matrix,
       cast matmul weights to bf16, zero-pad the final Linear to lane width."""
    per_layer = []
    for h in range(HIDDEN_LAYERS):
        base = 2 * ROTATIONS * h
        M = rots[base]
        for r in range(1, ROTATIONS):
            M = M @ rots[base + r]
        M = M * diag[h][None, :]            # right-compose diag(D_h): scale cols
        for r in range(ROTATIONS, 2 * ROTATIONS):
            M = M @ rots[base + r]
        per_layer.append(M)
    layer_mats = jnp.stack(per_layer).astype(jnp.bfloat16)
    w_pad = jnp.pad(w, ((0, 0), (0, INP_SIZE - OUTP_SIZE))).astype(jnp.bfloat16)
    b_pad = jnp.pad(b, ((0, 0), (0, INP_SIZE - OUTP_SIZE))).astype(jnp.float32)
    return layer_mats, bias.astype(jnp.float32), w_pad, b_pad


def vpnn_reference(x, rots, diag, bias, w, b):
    """Pure-JAX f32 reference mirroring the PyTorch layer sequence."""
    half = x.shape[-1] // 2
    li = 0
    for h in range(HIDDEN_LAYERS):
        for _ in range(ROTATIONS):
            x = x @ rots[li]; li += 1
        x = x * diag[h][None, :]
        for _ in range(ROTATIONS):
            x = x @ rots[li]; li += 1
        x = x + bias[h][None, :]
        x1 = x[:, :half]
        t = _chebyshev_T(jnp.clip(x1, -1.0, 1.0), CHEB_M)
        x = jnp.concatenate([x1, x[:, half:] + t], axis=-1)
    return x @ w + b


def vpnn_fused_reference(x, layer_mats, bias, w_pad, b_pad):
    """Pure-JAX reproduction of the exact math the kernel performs."""
    half = x.shape[-1] // 2
    for h in range(HIDDEN_LAYERS):
        x = jnp.dot(x.astype(jnp.bfloat16), layer_mats[h],
                    preferred_element_type=jnp.float32)
        x = x + bias[h][None, :]
        x1 = x[:, :half]
        t = _chebyshev_T(jnp.clip(x1, -1.0, 1.0), CHEB_M)
        x = jnp.concatenate([x1, x[:, half:] + t], axis=-1)
    y = jnp.dot(x.astype(jnp.bfloat16), w_pad,
                preferred_element_type=jnp.float32) + b_pad
    return y[:, :OUTP_SIZE]


if __name__ == "__main__":
    key = jax.random.PRNGKey(0)
    keys = jax.random.split(key, 6)

    rot_keys = jax.random.split(keys[0], N_ROT)
    rots = jnp.stack([make_rotation_matrix(k, INP_SIZE) for k in rot_keys])

    diag_t = jax.random.uniform(keys[1], (HIDDEN_LAYERS, INP_SIZE // 2),
                                minval=0.5, maxval=1.0)
    d = DIAG_M + diag_t ** 2
    diag = jnp.concatenate([d, 1.0 / d], axis=-1)        # (H, N), row product == 1

    bias = 0.1 * jax.random.normal(keys[2], (HIDDEN_LAYERS, INP_SIZE))

    kfan = 1.0 / jnp.sqrt(float(INP_SIZE))
    w = jax.random.uniform(keys[3], (INP_SIZE, OUTP_SIZE), minval=-kfan, maxval=kfan)
    b = jax.random.uniform(keys[4], (1, OUTP_SIZE), minval=-kfan, maxval=kfan)

    x = jax.random.normal(keys[5], (BATCH, INP_SIZE), dtype=jnp.float32)

    layer_mats, bias_f32, w_pad, b_pad = prepare_params(rots, diag, bias, w, b)

    out = vpnn_forward(x, layer_mats, bias_f32, w_pad, b_pad)
    out = jax.block_until_ready(out)
    assert out.shape == (BATCH, OUTP_SIZE)

    # tight check: kernel vs a pure-JAX reproduction of the same fused bf16 math
    ref_fused = vpnn_fused_reference(x, layer_mats, bias_f32, w_pad, b_pad)
    assert jnp.allclose(out, ref_fused, rtol=1e-3, atol=1e-3), "kernel != fused math"

    # loose check: vs the layer-by-layer f32 reference (covers precomposition
    # + bf16 weight quantization drift)
    ref_exact = vpnn_reference(x, rots, diag, bias, w, b)
    assert jnp.allclose(out, ref_exact, rtol=5e-2, atol=5e-2), "mismatch vs reference"

    print("KERNEL_OK")
</pallas_src>

<mosaic_0001>
module attributes {stable_mosaic.version = 11 : i64} {
  func.func @vpnn_kernel(%arg0: i32, %arg1: memref<256x128xf32, #tpu.memory_space<vmem>>, %arg2: memref<2x128x128xbf16, #tpu.memory_space<vmem>>, %arg3: memref<2x128xf32, #tpu.memory_space<vmem>>, %arg4: memref<128x128xbf16, #tpu.memory_space<vmem>>, %arg5: memref<1x128xf32, #tpu.memory_space<vmem>>, %arg6: memref<256x128xf32, #tpu.memory_space<vmem>>) attributes {dimension_semantics = [#tpu.dimension_semantics<parallel>], iteration_bounds = array<i64: 2>, scalar_prefetch = 0 : i64, scratch_operands = 0 : i64, tpu.core_type = #tpu.core_type<tc>, window_params = [{transform_indices = @transform_0, window_bounds = array<i64: 256, 128>}, {pipeline_mode = #tpu.pipeline_mode<synchronous>, transform_indices = @transform_1, window_bounds = array<i64: 2, 128, 128>}, {pipeline_mode = #tpu.pipeline_mode<synchronous>, transform_indices = @transform_2, window_bounds = array<i64: 2, 128>}, {pipeline_mode = #tpu.pipeline_mode<synchronous>, transform_indices = @transform_3, window_bounds = array<i64: 128, 128>}, {pipeline_mode = #tpu.pipeline_mode<synchronous>, transform_indices = @transform_4, window_bounds = array<i64: 1, 128>}, {transform_indices = @transform_5, window_bounds = array<i64: 256, 128>}]} {
    %c0 = arith.constant 0 : index
    %c0_0 = arith.constant 0 : index
    %0 = vector.load %arg1[%c0, %c0_0] : memref<256x128xf32, #tpu.memory_space<vmem>>, vector<256x128xf32>
    %1 = tpu.iota {dimensions = array<i32: 1>} : vector<256x128xi32>
    %c64_i32 = arith.constant 64 : i32
    %2 = vector.broadcast %c64_i32 : i32 to vector<256x128xi32>
    %3 = arith.cmpi sge, %1, %2 : vector<256x128xi32>
    %4 = arith.truncf %0 : vector<256x128xf32> to vector<256x128xbf16>
    %c0_1 = arith.constant 0 : index
    %c0_2 = arith.constant 0 : index
    %c0_3 = arith.constant 0 : index
    %5 = vector.load %arg2[%c0_1, %c0_2, %c0_3] : memref<2x128x128xbf16, #tpu.memory_space<vmem>>, vector<1x128x128xbf16>
    %6 = vector.shape_cast %5 : vector<1x128x128xbf16> to vector<128x128xbf16>
    %cst = arith.constant dense<0.000000e+00> : vector<256x128xf32>
    %7 = tpu.matmul %4, %6, %cst {dimension_numbers = #tpu.dot_dimension_numbers<[1], [0], [0], [1], [0, 0, 1, 1], [], []>} : vector<256x128xbf16>, vector<128x128xbf16>, vector<256x128xf32> -> vector<256x128xf32>
    %c0_4 = arith.constant 0 : index
    %c0_5 = arith.constant 0 : index
    %8 = vector.load %arg3[%c0_4, %c0_5] : memref<2x128xf32, #tpu.memory_space<vmem>>, vector<1x128xf32>
    %9 = vector.broadcast %8 : vector<1x128xf32> to vector<256x128xf32>
    %10 = arith.addf %7, %9 : vector<256x128xf32>
    %c64_i32_6 = arith.constant 64 : i32
    %11 = tpu.dynamic_rotate %10 by %c64_i32_6 dim 1 : vector<256x128xf32>, i32 -> vector<256x128xf32>
    %cst_7 = arith.constant -1.000000e+00 : f32
    %cst_8 = arith.constant 1.000000e+00 : f32
    %12 = vector.broadcast %cst_7 : f32 to vector<256x128xf32>
    %13 = arith.maximumf %12, %11 : vector<256x128xf32>
    %14 = vector.broadcast %cst_8 : f32 to vector<256x128xf32>
    %15 = arith.minimumf %14, %13 : vector<256x128xf32>
    %cst_9 = arith.constant 1.000000e+00 : f32
    %16 = vector.broadcast %cst_9 : f32 to vector<256x128xf32>
    %cst_10 = arith.constant 2.000000e+00 : f32
    %17 = vector.broadcast %cst_10 : f32 to vector<256x128xf32>
    %18 = arith.mulf %17, %15 : vector<256x128xf32>
    %19 = arith.mulf %18, %15 : vector<256x128xf32>
    %20 = arith.subf %19, %16 : vector<256x128xf32>
    %cst_11 = arith.constant 0.000000e+00 : f32
    %21 = vector.broadcast %cst_11 : f32 to vector<256x128xf32>
    %22 = arith.select %3, %20, %21 : vector<256x128xi1>, vector<256x128xf32>
    %23 = arith.addf %10, %22 : vector<256x128xf32>
    %24 = arith.truncf %23 : vector<256x128xf32> to vector<256x128xbf16>
    %c1 = arith.constant 1 : index
    %c0_12 = arith.constant 0 : index
    %c0_13 = arith.constant 0 : index
    %25 = vector.load %arg2[%c1, %c0_12, %c0_13] : memref<2x128x128xbf16, #tpu.memory_space<vmem>>, vector<1x128x128xbf16>
    %26 = vector.shape_cast %25 : vector<1x128x128xbf16> to vector<128x128xbf16>
    %cst_14 = arith.constant dense<0.000000e+00> : vector<256x128xf32>
    %27 = tpu.matmul %24, %26, %cst_14 {dimension_numbers = #tpu.dot_dimension_numbers<[1], [0], [0], [1], [0, 0, 1, 1], [], []>} : vector<256x128xbf16>, vector<128x128xbf16>, vector<256x128xf32> -> vector<256x128xf32>
    %c1_15 = arith.constant 1 : index
    %c0_16 = arith.constant 0 : index
    %28 = vector.load %arg3[%c1_15, %c0_16] : memref<2x128xf32, #tpu.memory_space<vmem>>, vector<1x128xf32>
    %29 = vector.broadcast %28 : vector<1x128xf32> to vector<256x128xf32>
    %30 = arith.addf %27, %29 : vector<256x128xf32>
    %c64_i32_17 = arith.constant 64 : i32
    %31 = tpu.dynamic_rotate %30 by %c64_i32_17 dim 1 : vector<256x128xf32>, i32 -> vector<256x128xf32>
    %cst_18 = arith.constant -1.000000e+00 : f32
    %cst_19 = arith.constant 1.000000e+00 : f32
    %32 = vector.broadcast %cst_18 : f32 to vector<256x128xf32>
    %33 = arith.maximumf %32, %31 : vector<256x128xf32>
    %34 = vector.broadcast %cst_19 : f32 to vector<256x128xf32>
    %35 = arith.minimumf %34, %33 : vector<256x128xf32>
    %cst_20 = arith.constant 1.000000e+00 : f32
    %36 = vector.broadcast %cst_20 : f32 to vector<256x128xf32>
    %cst_21 = arith.constant 2.000000e+00 : f32
    %37 = vector.broadcast %cst_21 : f32 to vector<256x128xf32>
    %38 = arith.mulf %37, %35 : vector<256x128xf32>
    %39 = arith.mulf %38, %35 : vector<256x128xf32>
    %40 = arith.subf %39, %36 : vector<256x128xf32>
    %cst_22 = arith.constant 0.000000e+00 : f32
    %41 = vector.broadcast %cst_22 : f32 to vector<256x128xf32>
    %42 = arith.select %3, %40, %41 : vector<256x128xi1>, vector<256x128xf32>
    %43 = arith.addf %30, %42 : vector<256x128xf32>
    %44 = arith.truncf %43 : vector<256x128xf32> to vector<256x128xbf16>
    %c0_23 = arith.constant 0 : index
    %c0_24 = arith.constant 0 : index
    %45 = vector.load %arg4[%c0_23, %c0_24] : memref<128x128xbf16, #tpu.memory_space<vmem>>, vector<128x128xbf16>
    %cst_25 = arith.constant dense<0.000000e+00> : vector<256x128xf32>
    %46 = tpu.matmul %44, %45, %cst_25 {dimension_numbers = #tpu.dot_dimension_numbers<[1], [0], [0], [1], [0, 0, 1, 1], [], []>} : vector<256x128xbf16>, vector<128x128xbf16>, vector<256x128xf32> -> vector<256x128xf32>
    %c0_26 = arith.constant 0 : index
    %c0_27 = arith.constant 0 : index
    %47 = vector.load %arg5[%c0_26, %c0_27] : memref<1x128xf32, #tpu.memory_space<vmem>>, vector<1x128xf32>
    %48 = vector.broadcast %47 : vector<1x128xf32> to vector<256x128xf32>
    %49 = arith.addf %46, %48 : vector<256x128xf32>
    %c0_28 = arith.constant 0 : index
    %c0_29 = arith.constant 0 : index
    %50 = vector.load %arg6[%c0_28, %c0_29] : memref<256x128xf32, #tpu.memory_space<vmem>>, vector<256x128xf32>
    tpu.vector_store %arg6[%c0_28, %c0_29], %49 {strides = array<i32>} : memref<256x128xf32, #tpu.memory_space<vmem>>, vector<256x128xf32>,
    return
  }
  func.func @transform_0(%arg0: i32) -> (i32, i32) {
    %c0_i32 = arith.constant 0 : i32
    %c0_i32_0 = arith.constant 0 : i32
    return %arg0, %c0_i32 : i32, i32
  }
  func.func @transform_1(%arg0: i32) -> (i32, i32, i32) {
    %c0_i32 = arith.constant 0 : i32
    %c0_i32_0 = arith.constant 0 : i32
    %c0_i32_1 = arith.constant 0 : i32
    %c0_i32_2 = arith.constant 0 : i32
    return %c0_i32, %c0_i32_0, %c0_i32_1 : i32, i32, i32
  }
  func.func @transform_2(%arg0: i32) -> (i32, i32) {
    %c0_i32 = arith.constant 0 : i32
    %c0_i32_0 = arith.constant 0 : i32
    %c0_i32_1 = arith.constant 0 : i32
    return %c0_i32, %c0_i32_0 : i32, i32
  }
  func.func @transform_3(%arg0: i32) -> (i32, i32) {
    %c0_i32 = arith.constant 0 : i32
    %c0_i32_0 = arith.constant 0 : i32
    %c0_i32_1 = arith.constant 0 : i32
    return %c0_i32, %c0_i32_0 : i32, i32
  }
  func.func @transform_4(%arg0: i32) -> (i32, i32) {
    %c0_i32 = arith.constant 0 : i32
    %c0_i32_0 = arith.constant 0 : i32
    %c0_i32_1 = arith.constant 0 : i32
    return %c0_i32, %c0_i32_0 : i32, i32
  }
  func.func @transform_5(%arg0: i32) -> (i32, i32) {
    %c0_i32 = arith.constant 0 : i32
    %c0_i32_0 = arith.constant 0 : i32
    return %arg0, %c0_i32 : i32, i32
  }
}

</mosaic_0001>

<llo_original>
// kernel: vpnn_forward.1
$region0: #{vpnn_forward.1}
  #allocation0 [shape = 'u32[]', space=smem, size = 0x4, offset = 0x4, fixed_abs, tag = 'smem constant byte address 0x4 - core index']
  #allocation1 [shape = 'u32[144,128]{1,0:T(1,128)}', space=vmem, size = 0x12000, scoped, tag = 'internal scratch']
  %s0 = inlined_call_operand.hbm [shape: f32[512,128], index: 0, kind: input, shape index: {}]
  %s1 = inlined_call_operand.hbm [shape: bf16[2,128,128], index: 1, kind: input, shape index: {}]
  %s2 = inlined_call_operand.vmem [shape: f32[2,128], index: 2, kind: input, shape index: {}]
  %s3 = inlined_call_operand.hbm [shape: bf16[128,128], index: 3, kind: input, shape index: {}]
  %s4 = inlined_call_operand.vmem [shape: f32[1,128], index: 4, kind: input, shape index: {}]
  %s5 = inlined_call_operand.vmem [shape: f32[512,128], index: 5, kind: output, shape index: {}]
  %s6 = sld [smem:[#allocation0]]
  $region65: #{vpnn_forward.1} parent=0
    _
  %s8 = ssub.s32 1, %s6
  %s9 = scalar_select 0, %s8, %s6
  $region1: #{vpnn_forward.1} parent=0
    #allocation2 [shape = 'u8[262144]{0}', space=vmem, size = 0x40000, scoped, tag = 'input window, operand 0']
    #allocation3 [shape = 's32[2]{0}', space=sflag, size = 0x8, scoped, tag = 'scoped memory for vpnn_forward.1']
    #allocation4 [shape = 'u8[65536]{0}', space=vmem, size = 0x10000, scoped, tag = 'input window, operand 1, single buffered']
    #allocation5 [shape = 's32[1]{0}', space=sflag, size = 0x4, scoped, tag = 'scoped memory for vpnn_forward.1']
    #allocation6 [shape = 'u8[32768]{0}', space=vmem, size = 0x8000, scoped, tag = 'input window, operand 3, single buffered']
    %10 = vsyncpa [#allocation3], 0
    %s11 = scalar_lea.sflag [#allocation3], 1
    %12 = vsyncpa %s11, 0
    %13 = vsyncpa [#allocation5], 0
    loop: start=0, step=1, limit=4
    $region2: #{vpnn_forward.1} parent=1 // loop_pre_header
      _
    $region3: #{vpnn_forward.1} parent=1 // loop_header
      %s15 = sphi 0, %s19
      %p16 = scmp.ge.s32.totalorder %s15, 4
      %s25 = sphi 0, %s27
      %s28 = sphi 0, %s25
      %s29 = sphi 0, %s28
      %s45 = sphi 0, %s29
      %s49 = sphi 0, %s49
      %s51 = sphi 0, %s49
      %s52 = sphi 0, %s51
      %s66 = sphi 0, %s52
      %s70 = sphi 0, %s70
      %s72 = sphi 0, %s70
      %s73 = sphi 0, %s72
      %s87 = sphi 0, %s73
      %s91 = sphi 0, %s91
      %s93 = sphi 0, %s91
      %s94 = sphi 0, %s93
      %s108 = sphi 0, %s94
      %s112 = sphi 0, %s112
      %s114 = sphi 0, %s112
      %s115 = sphi 0, %s114
      %s129 = sphi 0, %s115
      %s135 = sphi 0, %s137
      %s138 = sphi 0, %s135
      %s139 = sphi 0, %s138
      %s155 = sphi 0, %s139
    $region4: #{vpnn_forward.1} parent=1 // loop_header_branch
      %18 = sbr.rel (%p16) target = $region8
    $region5: #{vpnn_forward.1} parent=1 // loop_body
      %s20 = ssub.s32 %s15, 1
      %s21 = ssub.s32 %s15, 2
      %s22 = sadd.s32 %s15, 1
      %s23 = ssub.s32 %s15, %s22
      %p24 = scmp.eq.s32.totalorder %s23, 0
      %s26 = sadd.s32 %s25, 1
      %s27 = scalar_select %p24, %s25, %s26
      %p30 = pneg %p24
      %p31 = scmp.eq.s32.totalorder %s15, 1
      %p32 = por %p30, %p31
      %p33 = scmp.ne.s32.totalorder %s25, %s28
      %p34 = scmp.eq.s32.totalorder %s15, 0
      %p35 = por %p33, %p34
      %p36 = scmp.ne.s32.totalorder %s25, %s28
      %p37 = scmp.eq.s32.totalorder %s20, 1
      %p38 = por %p36, %p37
      %p39 = scmp.ne.s32.totalorder %s28, %s29
      %p40 = scmp.eq.s32.totalorder %s20, 0
      %p41 = por %p39, %p40
      %p42 = scmp.ne.s32.totalorder %s28, %s29
      %p43 = scmp.eq.s32.totalorder %s21, 1
      %p44 = por %p42, %p43
      %p46 = scmp.ne.s32.totalorder %s29, %s45
      %p47 = scmp.eq.s32.totalorder %s21, 0
      %p48 = por %p46, %p47
      %s50 = sadd.s32 %s49, 1
      %p53 = scmp.eq.s32.totalorder %s15, 1
      %p54 = scmp.ne.s32.totalorder %s49, %s51
      %p55 = scmp.eq.s32.totalorder %s15, 0
      %p56 = por %p54, %p55
      %p57 = scmp.ne.s32.totalorder %s49, %s51
      %p58 = scmp.eq.s32.totalorder %s20, 1
      %p59 = por %p57, %p58
      %p60 = scmp.ne.s32.totalorder %s51, %s52
      %p61 = scmp.eq.s32.totalorder %s20, 0
      %p62 = por %p60, %p61
      %p63 = scmp.ne.s32.totalorder %s51, %s52
      %p64 = scmp.eq.s32.totalorder %s21, 1
      %p65 = por %p63, %p64
      %p67 = scmp.ne.s32.totalorder %s52, %s66
      %p68 = scmp.eq.s32.totalorder %s21, 0
      %p69 = por %p67, %p68
      %s71 = sadd.s32 %s70, 1
      %p74 = scmp.eq.s32.totalorder %s15, 1
      %p75 = scmp.ne.s32.totalorder %s70, %s72
      %p76 = scmp.eq.s32.totalorder %s15, 0
      %p77 = por %p75, %p76
      %p78 = scmp.ne.s32.totalorder %s70, %s72
      %p79 = scmp.eq.s32.totalorder %s20, 1
      %p80 = por %p78, %p79
      %p81 = scmp.ne.s32.totalorder %s72, %s73
      %p82 = scmp.eq.s32.totalorder %s20, 0
      %p83 = por %p81, %p82
      %p84 = scmp.ne.s32.totalorder %s72, %s73
      %p85 = scmp.eq.s32.totalorder %s21, 1
      %p86 = por %p84, %p85
      %p88 = scmp.ne.s32.totalorder %s73, %s87
      %p89 = scmp.eq.s32.totalorder %s21, 0
      %p90 = por %p88, %p89
      %s92 = sadd.s32 %s91, 1
      %p95 = scmp.eq.s32.totalorder %s15, 1
      %p96 = scmp.ne.s32.totalorder %s91, %s93
      %p97 = scmp.eq.s32.totalorder %s15, 0
      %p98 = por %p96, %p97
      %p99 = scmp.ne.s32.totalorder %s91, %s93
      %p100 = scmp.eq.s32.totalorder %s20, 1
      %p101 = por %p99, %p100
      %p102 = scmp.ne.s32.totalorder %s93, %s94
      %p103 = scmp.eq.s32.totalorder %s20, 0
      %p104 = por %p102, %p103
      %p105 = scmp.ne.s32.totalorder %s93, %s94
      %p106 = scmp.eq.s32.totalorder %s21, 1
      %p107 = por %p105, %p106
      %p109 = scmp.ne.s32.totalorder %s94, %s108
      %p110 = scmp.eq.s32.totalorder %s21, 0
      %p111 = por %p109, %p110
      %s113 = sadd.s32 %s112, 1
      %p116 = scmp.eq.s32.totalorder %s15, 1
      %p117 = scmp.ne.s32.totalorder %s112, %s114
      %p118 = scmp.eq.s32.totalorder %s15, 0
      %p119 = por %p117, %p118
      %p120 = scmp.ne.s32.totalorder %s112, %s114
      %p121 = scmp.eq.s32.totalorder %s20, 1
      %p122 = por %p120, %p121
      %p123 = scmp.ne.s32.totalorder %s114, %s115
      %p124 = scmp.eq.s32.totalorder %s20, 0
      %p125 = por %p123, %p124
      %p126 = scmp.ne.s32.totalorder %s114, %s115
      %p127 = scmp.eq.s32.totalorder %s21, 1
      %p128 = por %p126, %p127
      %p130 = scmp.ne.s32.totalorder %s115, %s129
      %p131 = scmp.eq.s32.totalorder %s21, 0
      %p132 = por %p130, %p131
      %s133 = ssub.s32 %s15, %s22
      %p134 = scmp.eq.s32.totalorder %s133, 0
      %s136 = sadd.s32 %s135, 1
      %s137 = scalar_select %p134, %s135, %s136
      %p140 = pneg %p134
      %p141 = scmp.eq.s32.totalorder %s15, 1
      %p142 = por %p140, %p141
      %p143 = scmp.ne.s32.totalorder %s135, %s138
      %p144 = scmp.eq.s32.totalorder %s15, 0
      %p145 = por %p143, %p144
      %p146 = scmp.ne.s32.totalorder %s135, %s138
      %p147 = scmp.eq.s32.totalorder %s20, 1
      %p148 = por %p146, %p147
      %p149 = scmp.ne.s32.totalorder %s138, %s139
      %p150 = scmp.eq.s32.totalorder %s20, 0
      %p151 = por %p149, %p150
      %p152 = scmp.ne.s32.totalorder %s138, %s139
      %p153 = scmp.eq.s32.totalorder %s21, 1
      %p154 = por %p152, %p153
      %p156 = scmp.ne.s32.totalorder %s139, %s155
      %p157 = scmp.eq.s32.totalorder %s21, 0
      %p158 = por %p156, %p157
      %p159 = scmp.le.s32.totalorder 1, %s15
      %p160 = scmp.lt.s32.totalorder %s15, 3
      %p161 = pnand %p159, %p160
      %p162 = pneg %p161
      // Predicated region
      $region9: #{vpnn_forward.1} parent=5 // pred_check
        _
      $region10: #{vpnn_forward.1} parent=5 // pred_check_branch
        %164 = sbr.rel (%p161) target = $region12
      $region11: #{vpnn_forward.1} parent=5 // pred_region
        %s165 = ssub.s32 %s15, 1
        // Predicated region
        $region13: #{vpnn_forward.1} parent=11 // pred_check
          %p166 = pneg %p62
        $region14: #{vpnn_forward.1} parent=11 // pred_check_branch
          %168 = sbr.rel (%p166) target = $region16
        $region15: #{vpnn_forward.1} parent=11 // pred_region
          %s170 = ssub.s32 2048, 2048
          %171 = vsyncadd [#allocation5], %s170
          %s172 = sshll.u32 [#allocation4], 4
          %s173 = int_to_ptr.vmem [resolvable:$true] %s172
          %178 = dma.hbm_to_vmem [thread:$0]  %s1, 2048, %s173, [#allocation5], 64, 64, 4
        $region16: #{vpnn_forward.1} parent=11 // pred_fallthru
          _
        // Predicated region
        $region17: #{vpnn_forward.1} parent=11 // pred_check
          %p179 = pneg %p83
        $region18: #{vpnn_forward.1} parent=11 // pred_check_branch
          %181 = sbr.rel (%p179) target = $region20
        $region19: #{vpnn_forward.1} parent=11 // pred_region
          _
        $region20: #{vpnn_forward.1} parent=11 // pred_fallthru
          _
        // Predicated region
        $region21: #{vpnn_forward.1} parent=11 // pred_check
          %p182 = pneg %p104
        $region22: #{vpnn_forward.1} parent=11 // pred_check_branch
          %184 = sbr.rel (%p182) target = $region24
        $region23: #{vpnn_forward.1} parent=11 // pred_region
          %s186 = ssub.s32 1024, 1024
          %187 = vsyncadd [#allocation5], %s186
          %s188 = sshll.u32 [#allocation6], 4
          %s189 = int_to_ptr.vmem [resolvable:$true] %s188
          %194 = dma.hbm_to_vmem [thread:$0]  %s3, 1024, %s189, [#allocation5], 64, 64, 4
        $region24: #{vpnn_forward.1} parent=11 // pred_fallthru
          _
        // Predicated region
        $region25: #{vpnn_forward.1} parent=11 // pred_check
          %p195 = pneg %p125
        $region26: #{vpnn_forward.1} parent=11 // pred_check_branch
          %197 = sbr.rel (%p195) target = $region28
        $region27: #{vpnn_forward.1} parent=11 // pred_region
          _
        $region28: #{vpnn_forward.1} parent=11 // pred_fallthru
          _
      $region12: #{vpnn_forward.1} parent=5 // pred_fallthru
        _
      %p198 = scmp.lt.s32.totalorder %s15, 2
      // Predicated region
      $region29: #{vpnn_forward.1} parent=5 // pred_check
        %p199 = pneg %p198
      $region30: #{vpnn_forward.1} parent=5 // pred_check_branch
        %201 = sbr.rel (%p199) target = $region32
      $region31: #{vpnn_forward.1} parent=5 // pred_region
        // Predicated region
        $region33: #{vpnn_forward.1} parent=31 // pred_check
          %p202 = pneg %p35
        $region34: #{vpnn_forward.1} parent=31 // pred_check_branch
          %204 = sbr.rel (%p202) target = $region36
        $region35: #{vpnn_forward.1} parent=31 // pred_region
          %s205 = sand.u32 %s25, 1
          %s206 = scalar_lea.sflag [#allocation3], %s205
          %s207 = sand.u32 %s25, 1
          %s208 = smul.addr %s207, 256
          %s209 = scalar_lea.vmem [#allocation2], %s208
          %s210 = smul.u32 32, %s15
          %s212 = ssub.s32 4096, 4096
          %213 = vsyncadd %s206, %s212
          %s214 = smul.addr %s210, 128
          %s215 = scalar_lea.hbm %s0, %s214
          %s216 = sshll.u32 %s209, 4
          %s217 = int_to_ptr.vmem [resolvable:$true] %s216
          %222 = dma.hbm_to_vmem [thread:$0]  %s215, 4096, %s217, %s206, 128, 128, 8
        $region36: #{vpnn_forward.1} parent=31 // pred_fallthru
          _
      $region32: #{vpnn_forward.1} parent=5 // pred_fallthru
        _
      %p223 = scmp.le.s32.totalorder 1, %s15
      %p224 = scmp.lt.s32.totalorder %s15, 3
      %p225 = pnand %p223, %p224
      %p226 = pneg %p225
      // Predicated region
      $region37: #{vpnn_forward.1} parent=5 // pred_check
        _
      $region38: #{vpnn_forward.1} parent=5 // pred_check_branch
        %228 = sbr.rel (%p225) target = $region40
      $region39: #{vpnn_forward.1} parent=5 // pred_region
        %s229 = ssub.s32 %s15, 1
        %s230 = sand.u32 %s28, 1
        %s231 = scalar_lea.sflag [#allocation3], %s230
        %s232 = sand.u32 %s28, 1
        %s233 = smul.addr %s232, 256
        %s234 = scalar_lea.vmem [#allocation2], %s233
        // Predicated region
        $region41: #{vpnn_forward.1} parent=39 // pred_check
          %p235 = pneg %p41
        $region42: #{vpnn_forward.1} parent=39 // pred_check_branch
          %237 = sbr.rel (%p235) target = $region44
        $region43: #{vpnn_forward.1} parent=39 // pred_region
          %238 = dma.done %s231, 4096
        $region44: #{vpnn_forward.1} parent=39 // pred_fallthru
          _
        // Predicated region
        $region45: #{vpnn_forward.1} parent=39 // pred_check
          %p239 = pneg %p62
        $region46: #{vpnn_forward.1} parent=39 // pred_check_branch
          %241 = sbr.rel (%p239) target = $region48
        $region47: #{vpnn_forward.1} parent=39 // pred_region
          %242 = dma.done [#allocation5], 2048
        $region48: #{vpnn_forward.1} parent=39 // pred_fallthru
          _
        // Predicated region
        $region49: #{vpnn_forward.1} parent=39 // pred_check
          %p243 = pneg %p104
        $region50: #{vpnn_forward.1} parent=39 // pred_check_branch
          %245 = sbr.rel (%p243) target = $region52
        $region51: #{vpnn_forward.1} parent=39 // pred_region
          %246 = dma.done [#allocation5], 1024
        $region52: #{vpnn_forward.1} parent=39 // pred_fallthru
          _
        %s247 = sand.u32 %s28, 1
        %s248 = scalar_lea.sflag [#allocation3], %s247
        %s249 = sand.u32 %s28, 1
        %s250 = smul.addr %s249, 256
        %s251 = scalar_lea.vmem [#allocation2], %s250
        %p252 = pneg %p41
        %p253 = pneg %p38
        %p254 = pneg %p62
        %p255 = pneg %p59
        %p256 = pneg %p83
        %p257 = pneg %p80
        %p258 = pneg %p104
        %p259 = pneg %p101
        %p260 = pneg %p125
        %p261 = pneg %p122
        %p262 = pneg %p151
        %p263 = pneg %p148
        %s264 = smul.u32 32, %s20
        %p265 = scmp.lt.s32.totalorder %s264, 63
        %s266 = scalar_select %p265, %s264, 63
        %s267 = smul.addr %s266, 8
        %s268 = scalar_lea.vmem %s5, %s267
        %s269 = smul.u32 32, %s20
        %s270 = smul.u32 32, %s20
        %p271 = scmp.lt.s32.totalorder %s270, 63
        %s272 = scalar_select %p271, %s270, 63
        %s273 = smul.addr %s272, 8
        %s274 = scalar_lea.vmem %s5, %s273
        %s275 = smul.u32 32, %s20
        %v277 = vld [vmem:[%s234] sm:$0xff]
        %v278 = vld [vmem:[%s234 + $0x8] sm:$0xff]
        %v279 = vld [vmem:[%s234 + $0x10] sm:$0xff]
        %v280 = vld [vmem:[%s234 + $0x18] sm:$0xff]
        %v281 = vld [vmem:[%s234 + $0x20] sm:$0xff]
        %v282 = vld [vmem:[%s234 + $0x28] sm:$0xff]
        %v283 = vld [vmem:[%s234 + $0x30] sm:$0xff]
        %v284 = vld [vmem:[%s234 + $0x38] sm:$0xff]
        %v285 = vld [vmem:[%s234 + $0x40] sm:$0xff]
        %v286 = vld [vmem:[%s234 + $0x48] sm:$0xff]
        %v287 = vld [vmem:[%s234 + $0x50] sm:$0xff]
        %v288 = vld [vmem:[%s234 + $0x58] sm:$0xff]
        %v289 = vld [vmem:[%s234 + $0x60] sm:$0xff]
        %v290 = vld [vmem:[%s234 + $0x68] sm:$0xff]
        %v291 = vld [vmem:[%s234 + $0x70] sm:$0xff]
        %v292 = vld [vmem:[%s234 + $0x78] sm:$0xff]
        %v293 = vld [vmem:[%s234 + $0x80] sm:$0xff]
        %v294 = vld [vmem:[%s234 + $0x88] sm:$0xff]
        %v295 = vld [vmem:[%s234 + $0x90] sm:$0xff]
        %v296 = vld [vmem:[%s234 + $0x98] sm:$0xff]
        %v297 = vld [vmem:[%s234 + $0xa0] sm:$0xff]
        %v298 = vld [vmem:[%s234 + $0xa8] sm:$0xff]
        %v299 = vld [vmem:[%s234 + $0xb0] sm:$0xff]
        %v300 = vld [vmem:[%s234 + $0xb8] sm:$0xff]
        %v301 = vld [vmem:[%s234 + $0xc0] sm:$0xff]
        %v302 = vld [vmem:[%s234 + $0xc8] sm:$0xff]
        %v303 = vld [vmem:[%s234 + $0xd0] sm:$0xff]
        %v304 = vld [vmem:[%s234 + $0xd8] sm:$0xff]
        %v305 = vld [vmem:[%s234 + $0xe0] sm:$0xff]
        %v306 = vld [vmem:[%s234 + $0xe8] sm:$0xff]
        %v307 = vld [vmem:[%s234 + $0xf0] sm:$0xff]
        %v308 = vld [vmem:[%s234 + $0xf8] sm:$0xff]
        %v309 = vlaneseq
        %v310 = vand.u32 %v309, 127
        %vm311 = vcmp.ge.s32.totalorder %v310, 64
        %v312 = vpack.c.bf16 %v278, %v277
        %v313 = vpack.c.bf16 %v280, %v279
        %v314 = vpack.c.bf16 %v282, %v281
        %v315 = vpack.c.bf16 %v284, %v283
        %v316 = vpack.c.bf16 %v286, %v285
        %v317 = vpack.c.bf16 %v288, %v287
        %v318 = vpack.c.bf16 %v290, %v289
        %v319 = vpack.c.bf16 %v292, %v291
        %v320 = vpack.c.bf16 %v294, %v293
        %v321 = vpack.c.bf16 %v296, %v295
        %v322 = vpack.c.bf16 %v298, %v297
        %v323 = vpack.c.bf16 %v300, %v299
        %v324 = vpack.c.bf16 %v302, %v301
        %v325 = vpack.c.bf16 %v304, %v303
        %v326 = vpack.c.bf16 %v306, %v305
        %v327 = vpack.c.bf16 %v308, %v307
        %v328 = vld [vmem:[#allocation4] sm:$0xf]
        %v329 = vld [vmem:[#allocation4 + $0x4] sm:$0xf]
        %v330 = vld [vmem:[#allocation4 + $0x8] sm:$0xf]
        %v331 = vld [vmem:[#allocation4 + $0xc] sm:$0xf]
        %v332 = vld [vmem:[#allocation4 + $0x10] sm:$0xf]
        %v333 = vld [vmem:[#allocation4 + $0x14] sm:$0xf]
        %v334 = vld [vmem:[#allocation4 + $0x18] sm:$0xf]
        %v335 = vld [vmem:[#allocation4 + $0x1c] sm:$0xf]
        %v336 = vld [vmem:[#allocation4 + $0x20] sm:$0xf]
        %v337 = vld [vmem:[#allocation4 + $0x24] sm:$0xf]
        %v338 = vld [vmem:[#allocation4 + $0x28] sm:$0xf]
        %v339 = vld [vmem:[#allocation4 + $0x2c] sm:$0xf]
        %v340 = vld [vmem:[#allocation4 + $0x30] sm:$0xf]
        %v341 = vld [vmem:[#allocation4 + $0x34] sm:$0xf]
        %v342 = vld [vmem:[#allocation4 + $0x38] sm:$0xf]
        %v343 = vld [vmem:[#allocation4 + $0x3c] sm:$0xf]
        %v344 = vld [vmem:[%s2] sm:$0x1]
        %v345 = vlaneseq
        %v346 = vshrl.u32 %v345, 7
        %v347 = vsub.s32 0, %v346
        %v348 = vrot.slane %v344, %v347
        %v365 = vunpack.c.l.b16 %v328
        %v366 = vunpack.c.l.b16 %v329
        %v367 = vunpack.c.l.b16 %v330
        %v368 = vunpack.c.l.b16 %v331
        %v369 = vunpack.c.l.b16 %v332
        %v370 = vunpack.c.l.b16 %v333
        %v371 = vunpack.c.l.b16 %v334
        %v372 = vunpack.c.l.b16 %v335
        %v373 = vunpack.c.l.b16 %v336
        %v374 = vunpack.c.l.b16 %v337
        %v375 = vunpack.c.l.b16 %v338
        %v376 = vunpack.c.l.b16 %v339
        %v377 = vunpack.c.l.b16 %v340
        %v378 = vunpack.c.l.b16 %v341
        %v379 = vunpack.c.l.b16 %v342
        %v380 = vunpack.c.l.b16 %v343
        %v381 = vpack.c.b16 %v366, %v365
        %v382 = vpack.c.b16 %v368, %v367
        %v383 = vpack.c.b16 %v370, %v369
        %v384 = vpack.c.b16 %v372, %v371
        %v385 = vpack.c.b16 %v374, %v373
        %v386 = vpack.c.b16 %v376, %v375
        %v387 = vpack.c.b16 %v378, %v377
        %v388 = vpack.c.b16 %v380, %v379
        %397 = vmatprep.subr.bf16.mxu0 0
        %398 = vmatpush1.bf16.msra.mxu0 %v381
        %399 = vmatprep.subr.bf16.mxu0 0
        %400 = vmatpush1.bf16.msra.mxu0 %v382
        %401 = vmatprep.subr.bf16.mxu0 0
        %402 = vmatpush1.bf16.msra.mxu0 %v383
        %403 = vmatprep.subr.bf16.mxu0 0
        %404 = vmatpush1.bf16.msra.mxu0 %v384
        %405 = vmatprep.subr.bf16.mxu0 0
        %406 = vmatpush1.bf16.msra.mxu0 %v385
        %407 = vmatprep.subr.bf16.mxu0 0
        %408 = vmatpush1.bf16.msra.mxu0 %v386
        %409 = vmatprep.subr.bf16.mxu0 0
        %410 = vmatpush1.bf16.msra.mxu0 %v387
        %411 = vmatprep.subr.bf16.mxu0 0
        %412 = vmatpush1.bf16.msra.mxu0 %v388
        %413 = vmatprep.subr.bf16.mxu0 0
        %414 = vmatpush1.bf16.msra.mxu0 0
        %415 = vmatprep.subr.bf16.mxu0 0
        %416 = vmatpush1.bf16.msra.mxu0 0
        %417 = vmatprep.subr.bf16.mxu0 0
        %418 = vmatpush1.bf16.msra.mxu0 0
        %419 = vmatprep.subr.bf16.mxu0 0
        %420 = vmatpush1.bf16.msra.mxu0 0
        %421 = vmatprep.subr.bf16.mxu0 0
        %422 = vmatpush1.bf16.msra.mxu0 0
        %423 = vmatprep.subr.bf16.mxu0 0
        %424 = vmatpush1.bf16.msra.mxu0 0
        %425 = vmatprep.subr.bf16.mxu0 0
        %426 = vmatpush1.bf16.msra.mxu0 0
        %427 = vmatprep.subr.bf16.mxu0 0
        %428 = vmatpush1.bf16.msra.mxu0 0
        %429 = vmatprep.mubr.bf16.mxu0 0
        %430 = vmatmul.mubr.bf16.gmra.mrb[0].mxu0 %v312
        %v431 = vpop.f32.mrb[0].mxu0
        %v432 = vadd.f32 %v348, %v431
        %v433 = vpop.f32.mrb[0].mxu0
        %v434 = vpop.f32.mrb[0].mxu0
        %v435 = vadd.f32 %v348, %v434
        %v436 = vpop.f32.mrb[0].mxu0
        %437 = vmatprep.mubr.bf16.mxu0 0
        %438 = vmatmul.mubr.bf16.gmra.mrb[0].mxu0 %v313
        %v439 = vpop.f32.mrb[0].mxu0
        %v440 = vadd.f32 %v348, %v439
        %v441 = vpop.f32.mrb[0].mxu0
        %v442 = vpop.f32.mrb[0].mxu0
        %v443 = vadd.f32 %v348, %v442
        %v444 = vpop.f32.mrb[0].mxu0
        %445 = vmatprep.mubr.bf16.mxu0 0
        %446 = vmatmul.mubr.bf16.gmra.mrb[0].mxu0 %v314
        %v447 = vpop.f32.mrb[0].mxu0
        %v448 = vadd.f32 %v348, %v447
        %v449 = vpop.f32.mrb[0].mxu0
        %v450 = vpop.f32.mrb[0].mxu0
        %v451 = vadd.f32 %v348, %v450
        %v452 = vpop.f32.mrb[0].mxu0
        %453 = vmatprep.mubr.bf16.mxu0 0
        %454 = vmatmul.mubr.bf16.gmra.mrb[0].mxu0 %v315
        %v455 = vpop.f32.mrb[0].mxu0
        %v456 = vadd.f32 %v348, %v455
        %v457 = vpop.f32.mrb[0].mxu0
        %v458 = vpop.f32.mrb[0].mxu0
        %v459 = vadd.f32 %v348, %v458
        %v460 = vpop.f32.mrb[0].mxu0
        %461 = vmatprep.mubr.bf16.mxu0 0
        %462 = vmatmul.mubr.bf16.gmra.mrb[0].mxu0 %v316
        %v463 = vpop.f32.mrb[0].mxu0
        %v464 = vadd.f32 %v348, %v463
        %v465 = vpop.f32.mrb[0].mxu0
        %v466 = vpop.f32.mrb[0].mxu0
        %v467 = vadd.f32 %v348, %v466
        %v468 = vpop.f32.mrb[0].mxu0
        %469 = vmatprep.mubr.bf16.mxu0 0
        %470 = vmatmul.mubr.bf16.gmra.mrb[0].mxu0 %v317
        %v471 = vpop.f32.mrb[0].mxu0
        %v472 = vadd.f32 %v348, %v471
        %v473 = vpop.f32.mrb[0].mxu0
        %v474 = vpop.f32.mrb[0].mxu0
        %v475 = vadd.f32 %v348, %v474
        %v476 = vpop.f32.mrb[0].mxu0
        %477 = vmatprep.mubr.bf16.mxu0 0
        %478 = vmatmul.mubr.bf16.gmra.mrb[0].mxu0 %v318
        %v479 = vpop.f32.mrb[0].mxu0
        %v480 = vadd.f32 %v348, %v479
        %v481 = vpop.f32.mrb[0].mxu0
        %v482 = vpop.f32.mrb[0].mxu0
        %v483 = vadd.f32 %v348, %v482
        %v484 = vpop.f32.mrb[0].mxu0
        %485 = vmatprep.mubr.bf16.mxu0 0
        %486 = vmatmul.mubr.bf16.gmra.mrb[0].mxu0 %v319
        %v487 = vpop.f32.mrb[0].mxu0
        %v488 = vadd.f32 %v348, %v487
        %v489 = vpop.f32.mrb[0].mxu0
        %v490 = vpop.f32.mrb[0].mxu0
        %v491 = vadd.f32 %v348, %v490
        %v492 = vpop.f32.mrb[0].mxu0
        %493 = vmatprep.mubr.bf16.mxu0 0
        %494 = vmatmul.mubr.bf16.gmra.mrb[0].mxu0 %v320
        %v495 = vpop.f32.mrb[0].mxu0
        %v496 = vadd.f32 %v348, %v495
        %v497 = vpop.f32.mrb[0].mxu0
        %v498 = vpop.f32.mrb[0].mxu0
        %v499 = vadd.f32 %v348, %v498
        %v500 = vpop.f32.mrb[0].mxu0
        %501 = vmatprep.mubr.bf16.mxu0 0
        %502 = vmatmul.mubr.bf16.gmra.mrb[0].mxu0 %v321
        %v503 = vpop.f32.mrb[0].mxu0
        %v504 = vadd.f32 %v348, %v503
        %v505 = vpop.f32.mrb[0].mxu0
        %v506 = vpop.f32.mrb[0].mxu0
        %v507 = vadd.f32 %v348, %v506
        %v508 = vpop.f32.mrb[0].mxu0
        %509 = vmatprep.mubr.bf16.mxu0 0
        %510 = vmatmul.mubr.bf16.gmra.mrb[0].mxu0 %v322
        %v511 = vpop.f32.mrb[0].mxu0
        %v512 = vadd.f32 %v348, %v511
        %v513 = vpop.f32.mrb[0].mxu0
        %v514 = vpop.f32.mrb[0].mxu0
        %v515 = vadd.f32 %v348, %v514
        %v516 = vpop.f32.mrb[0].mxu0
        %517 = vmatprep.mubr.bf16.mxu0 0
        %518 = vmatmul.mubr.bf16.gmra.mrb[0].mxu0 %v323
        %v519 = vpop.f32.mrb[0].mxu0
        %v520 = vadd.f32 %v348, %v519
        %v521 = vpop.f32.mrb[0].mxu0
        %v522 = vpop.f32.mrb[0].mxu0
        %v523 = vadd.f32 %v348, %v522
        %v524 = vpop.f32.mrb[0].mxu0
        %525 = vmatprep.mubr.bf16.mxu0 0
        %526 = vmatmul.mubr.bf16.gmra.mrb[0].mxu0 %v324
        %v527 = vpop.f32.mrb[0].mxu0
        %v528 = vadd.f32 %v348, %v527
        %v529 = vpop.f32.mrb[0].mxu0
        %v530 = vpop.f32.mrb[0].mxu0
        %v531 = vadd.f32 %v348, %v530
        %v532 = vpop.f32.mrb[0].mxu0
        %533 = vmatprep.mubr.bf16.mxu0 0
        %534 = vmatmul.mubr.bf16.gmra.mrb[0].mxu0 %v325
        %v535 = vpop.f32.mrb[0].mxu0
        %v536 = vadd.f32 %v348, %v535
        %v537 = vpop.f32.mrb[0].mxu0
        %v538 = vpop.f32.mrb[0].mxu0
        %v539 = vadd.f32 %v348, %v538
        %v540 = vpop.f32.mrb[0].mxu0
        %541 = vmatprep.mubr.bf16.mxu0 0
        %542 = vmatmul.mubr.bf16.gmra.mrb[0].mxu0 %v326
        %v543 = vpop.f32.mrb[0].mxu0
        %v544 = vadd.f32 %v348, %v543
        %v545 = vpop.f32.mrb[0].mxu0
        %v546 = vpop.f32.mrb[0].mxu0
        %v547 = vadd.f32 %v348, %v546
        %v548 = vpop.f32.mrb[0].mxu0
        %549 = vmatprep.mubr.bf16.mxu0 0
        %550 = vmatmul.mubr.bf16.gmra.mrb[0].mxu0 %v327
        %v551 = vpop.f32.mrb[0].mxu0
        %v552 = vadd.f32 %v348, %v551
        %v553 = vpop.f32.mrb[0].mxu0
        %v554 = vpop.f32.mrb[0].mxu0
        %v555 = vadd.f32 %v348, %v554
        %v556 = vpop.f32.mrb[0].mxu0
        %557 = vdwg.mxu0
        %558 = vrot.lane.b32.xlu0 %v432, 64
        %v559 = vpop.permute.xlu0 %558
        %560 = vrot.lane.b32.xlu0 %v435, 64
        %v561 = vpop.permute.xlu0 %560
        %562 = vrot.lane.b32.xlu0 %v440, 64
        %v563 = vpop.permute.xlu0 %562
        %564 = vrot.lane.b32.xlu0 %v443, 64
        %v565 = vpop.permute.xlu0 %564
        %566 = vrot.lane.b32.xlu0 %v448, 64
        %v567 = vpop.permute.xlu0 %566
        %568 = vrot.lane.b32.xlu0 %v451, 64
        %v569 = vpop.permute.xlu0 %568
        %570 = vrot.lane.b32.xlu0 %v456, 64
        %v571 = vpop.permute.xlu0 %570
        %572 = vrot.lane.b32.xlu0 %v459, 64
        %v573 = vpop.permute.xlu0 %572
        %574 = vrot.lane.b32.xlu0 %v464, 64
        %v575 = vpop.permute.xlu0 %574
        %576 = vrot.lane.b32.xlu0 %v467, 64
        %v577 = vpop.permute.xlu0 %576
        %578 = vrot.lane.b32.xlu0 %v472, 64
        %v579 = vpop.permute.xlu0 %578
        %580 = vrot.lane.b32.xlu0 %v475, 64
        %v581 = vpop.permute.xlu0 %580
        %582 = vrot.lane.b32.xlu0 %v480, 64
        %v583 = vpop.permute.xlu0 %582
        %584 = vrot.lane.b32.xlu0 %v483, 64
        %v585 = vpop.permute.xlu0 %584
        %586 = vrot.lane.b32.xlu0 %v488, 64
        %v587 = vpop.permute.xlu0 %586
        %588 = vrot.lane.b32.xlu0 %v491, 64
        %v589 = vpop.permute.xlu0 %588
        %590 = vrot.lane.b32.xlu0 %v496, 64
        %v591 = vpop.permute.xlu0 %590
        %592 = vrot.lane.b32.xlu0 %v499, 64
        %v593 = vpop.permute.xlu0 %592
        %594 = vrot.lane.b32.xlu0 %v504, 64
        %v595 = vpop.permute.xlu0 %594
        %596 = vrot.lane.b32.xlu0 %v507, 64
        %v597 = vpop.permute.xlu0 %596
        %598 = vrot.lane.b32.xlu0 %v512, 64
        %v599 = vpop.permute.xlu0 %598
        %600 = vrot.lane.b32.xlu0 %v515, 64
        %v601 = vpop.permute.xlu0 %600
        %602 = vrot.lane.b32.xlu0 %v520, 64
        %v603 = vpop.permute.xlu0 %602
        %604 = vrot.lane.b32.xlu0 %v523, 64
        %v605 = vpop.permute.xlu0 %604
        %606 = vrot.lane.b32.xlu0 %v528, 64
        %v607 = vpop.permute.xlu0 %606
        %608 = vrot.lane.b32.xlu0 %v531, 64
        %v609 = vpop.permute.xlu0 %608
        %610 = vrot.lane.b32.xlu0 %v536, 64
        %v611 = vpop.permute.xlu0 %610
        %612 = vrot.lane.b32.xlu0 %v539, 64
        %v613 = vpop.permute.xlu0 %612
        %614 = vrot.lane.b32.xlu0 %v544, 64
        %v615 = vpop.permute.xlu0 %614
        %616 = vrot.lane.b32.xlu0 %v547, 64
        %v617 = vpop.permute.xlu0 %616
        %618 = vrot.lane.b32.xlu0 %v552, 64
        %v619 = vpop.permute.xlu0 %618
        %620 = vrot.lane.b32.xlu0 %v555, 64
        %v621 = vpop.permute.xlu0 %620
        %v622 = vmax.f32 %v559, -1.0
        %v623 = vmax.f32 %v561, -1.0
        %v624 = vmax.f32 %v563, -1.0
        %v625 = vmax.f32 %v565, -1.0
        %v626 = vmax.f32 %v567, -1.0
        %v627 = vmax.f32 %v569, -1.0
        %v628 = vmax.f32 %v571, -1.0
        %v629 = vmax.f32 %v573, -1.0
        %v630 = vmax.f32 %v575, -1.0
        %v631 = vmax.f32 %v577, -1.0
        %v632 = vmax.f32 %v579, -1.0
        %v633 = vmax.f32 %v581, -1.0
        %v634 = vmax.f32 %v583, -1.0
        %v635 = vmax.f32 %v585, -1.0
        %v636 = vmax.f32 %v587, -1.0
        %v637 = vmax.f32 %v589, -1.0
        %v638 = vmax.f32 %v591, -1.0
        %v639 = vmax.f32 %v593, -1.0
        %v640 = vmax.f32 %v595, -1.0
        %v641 = vmax.f32 %v597, -1.0
        %v642 = vmax.f32 %v599, -1.0
        %v643 = vmax.f32 %v601, -1.0
        %v644 = vmax.f32 %v603, -1.0
        %v645 = vmax.f32 %v605, -1.0
        %v646 = vmax.f32 %v607, -1.0
        %v647 = vmax.f32 %v609, -1.0
        %v648 = vmax.f32 %v611, -1.0
        %v649 = vmax.f32 %v613, -1.0
        %v650 = vmax.f32 %v615, -1.0
        %v651 = vmax.f32 %v617, -1.0
        %v652 = vmax.f32 %v619, -1.0
        %v653 = vmax.f32 %v621, -1.0
        %v654 = vmin.f32 %v622, 1.0
        %v655 = vmin.f32 %v623, 1.0
        %v656 = vmin.f32 %v624, 1.0
        %v657 = vmin.f32 %v625, 1.0
        %v658 = vmin.f32 %v626, 1.0
        %v659 = vmin.f32 %v627, 1.0
        %v660 = vmin.f32 %v628, 1.0
        %v661 = vmin.f32 %v629, 1.0
        %v662 = vmin.f32 %v630, 1.0
        %v663 = vmin.f32 %v631, 1.0
        %v664 = vmin.f32 %v632, 1.0
        %v665 = vmin.f32 %v633, 1.0
        %v666 = vmin.f32 %v634, 1.0
        %v667 = vmin.f32 %v635, 1.0
        %v668 = vmin.f32 %v636, 1.0
        %v669 = vmin.f32 %v637, 1.0
        %v670 = vmin.f32 %v638, 1.0
        %v671 = vmin.f32 %v639, 1.0
        %v672 = vmin.f32 %v640, 1.0
        %v673 = vmin.f32 %v641, 1.0
        %v674 = vmin.f32 %v642, 1.0
        %v675 = vmin.f32 %v643, 1.0
        %v676 = vmin.f32 %v644, 1.0
        %v677 = vmin.f32 %v645, 1.0
        %v678 = vmin.f32 %v646, 1.0
        %v679 = vmin.f32 %v647, 1.0
        %v680 = vmin.f32 %v648, 1.0
        %v681 = vmin.f32 %v649, 1.0
        %v682 = vmin.f32 %v650, 1.0
        %v683 = vmin.f32 %v651, 1.0
        %v684 = vmin.f32 %v652, 1.0
        %v685 = vmin.f32 %v653, 1.0
        %v686 = vmul.f32 %v654, 2.0
        %v687 = vmul.f32 %v655, 2.0
        %v688 = vmul.f32 %v656, 2.0
        %v689 = vmul.f32 %v657, 2.0
        %v690 = vmul.f32 %v658, 2.0
        %v691 = vmul.f32 %v659, 2.0
        %v692 = vmul.f32 %v660, 2.0
        %v693 = vmul.f32 %v661, 2.0
        %v694 = vmul.f32 %v662, 2.0
        %v695 = vmul.f32 %v663, 2.0
        %v696 = vmul.f32 %v664, 2.0
        %v697 = vmul.f32 %v665, 2.0
        %v698 = vmul.f32 %v666, 2.0
        %v699 = vmul.f32 %v667, 2.0
        %v700 = vmul.f32 %v668, 2.0
        %v701 = vmul.f32 %v669, 2.0
        %v702 = vmul.f32 %v670, 2.0
        %v703 = vmul.f32 %v671, 2.0
        %v704 = vmul.f32 %v672, 2.0
        %v705 = vmul.f32 %v673, 2.0
        %v706 = vmul.f32 %v674, 2.0
        %v707 = vmul.f32 %v675, 2.0
        %v708 = vmul.f32 %v676, 2.0
        %v709 = vmul.f32 %v677, 2.0
        %v710 = vmul.f32 %v678, 2.0
        %v711 = vmul.f32 %v679, 2.0
        %v712 = vmul.f32 %v680, 2.0
        %v713 = vmul.f32 %v681, 2.0
        %v714 = vmul.f32 %v682, 2.0
        %v715 = vmul.f32 %v683, 2.0
        %v716 = vmul.f32 %v684, 2.0
        %v717 = vmul.f32 %v685, 2.0
        %v718 = vmul.f32 %v686, %v654
        %v719 = vmul.f32 %v687, %v655
        %v720 = vmul.f32 %v688, %v656
        %v721 = vmul.f32 %v689, %v657
        %v722 = vmul.f32 %v690, %v658
        %v723 = vmul.f32 %v691, %v659
        %v724 = vmul.f32 %v692, %v660
        %v725 = vmul.f32 %v693, %v661
        %v726 = vmul.f32 %v694, %v662
        %v727 = vmul.f32 %v695, %v663
        %v728 = vmul.f32 %v696, %v664
        %v729 = vmul.f32 %v697, %v665
        %v730 = vmul.f32 %v698, %v666
        %v731 = vmul.f32 %v699, %v667
        %v732 = vmul.f32 %v700, %v668
        %v733 = vmul.f32 %v701, %v669
        %v734 = vmul.f32 %v702, %v670
        %v735 = vmul.f32 %v703, %v671
        %v736 = vmul.f32 %v704, %v672
        %v737 = vmul.f32 %v705, %v673
        %v738 = vmul.f32 %v706, %v674
        %v739 = vmul.f32 %v707, %v675
        %v740 = vmul.f32 %v708, %v676
        %v741 = vmul.f32 %v709, %v677
        %v742 = vmul.f32 %v710, %v678
        %v743 = vmul.f32 %v711, %v679
        %v744 = vmul.f32 %v712, %v680
        %v745 = vmul.f32 %v713, %v681
        %v746 = vmul.f32 %v714, %v682
        %v747 = vmul.f32 %v715, %v683
        %v748 = vmul.f32 %v716, %v684
        %v749 = vmul.f32 %v717, %v685
        %v750 = vsub.f32 %v718, 1.0
        %v751 = vsub.f32 %v719, 1.0
        %v752 = vsub.f32 %v720, 1.0
        %v753 = vsub.f32 %v721, 1.0
        %v754 = vsub.f32 %v722, 1.0
        %v755 = vsub.f32 %v723, 1.0
        %v756 = vsub.f32 %v724, 1.0
        %v757 = vsub.f32 %v725, 1.0
        %v758 = vsub.f32 %v726, 1.0
        %v759 = vsub.f32 %v727, 1.0
        %v760 = vsub.f32 %v728, 1.0
        %v761 = vsub.f32 %v729, 1.0
        %v762 = vsub.f32 %v730, 1.0
        %v763 = vsub.f32 %v731, 1.0
        %v764 = vsub.f32 %v732, 1.0
        %v765 = vsub.f32 %v733, 1.0
        %v766 = vsub.f32 %v734, 1.0
        %v767 = vsub.f32 %v735, 1.0
        %v768 = vsub.f32 %v736, 1.0
        %v769 = vsub.f32 %v737, 1.0
        %v770 = vsub.f32 %v738, 1.0
        %v771 = vsub.f32 %v739, 1.0
        %v772 = vsub.f32 %v740, 1.0
        %v773 = vsub.f32 %v741, 1.0
        %v774 = vsub.f32 %v742, 1.0
        %v775 = vsub.f32 %v743, 1.0
        %v776 = vsub.f32 %v744, 1.0
        %v777 = vsub.f32 %v745, 1.0
        %v778 = vsub.f32 %v746, 1.0
        %v779 = vsub.f32 %v747, 1.0
        %v780 = vsub.f32 %v748, 1.0
        %v781 = vsub.f32 %v749, 1.0
        %v782 = vsel %vm311, %v750, 0.0
        %v783 = vsel %vm311, %v751, 0.0
        %v784 = vsel %vm311, %v752, 0.0
        %v785 = vsel %vm311, %v753, 0.0
        %v786 = vsel %vm311, %v754, 0.0
        %v787 = vsel %vm311, %v755, 0.0
        %v788 = vsel %vm311, %v756, 0.0
        %v789 = vsel %vm311, %v757, 0.0
        %v790 = vsel %vm311, %v758, 0.0
        %v791 = vsel %vm311, %v759, 0.0
        %v792 = vsel %vm311, %v760, 0.0
        %v793 = vsel %vm311, %v761, 0.0
        %v794 = vsel %vm311, %v762, 0.0
        %v795 = vsel %vm311, %v763, 0.0
        %v796 = vsel %vm311, %v764, 0.0
        %v797 = vsel %vm311, %v765, 0.0
        %v798 = vsel %vm311, %v766, 0.0
        %v799 = vsel %vm311, %v767, 0.0
        %v800 = vsel %vm311, %v768, 0.0
        %v801 = vsel %vm311, %v769, 0.0
        %v802 = vsel %vm311, %v770, 0.0
        %v803 = vsel %vm311, %v771, 0.0
        %v804 = vsel %vm311, %v772, 0.0
        %v805 = vsel %vm311, %v773, 0.0
        %v806 = vsel %vm311, %v774, 0.0
        %v807 = vsel %vm311, %v775, 0.0
        %v808 = vsel %vm311, %v776, 0.0
        %v809 = vsel %vm311, %v777, 0.0
        %v810 = vsel %vm311, %v778, 0.0
        %v811 = vsel %vm311, %v779, 0.0
        %v812 = vsel %vm311, %v780, 0.0
        %v813 = vsel %vm311, %v781, 0.0
        %v814 = vadd.f32 %v432, %v782
        %v815 = vadd.f32 %v435, %v783
        %v816 = vadd.f32 %v440, %v784
        %v817 = vadd.f32 %v443, %v785
        %v818 = vadd.f32 %v448, %v786
        %v819 = vadd.f32 %v451, %v787
        %v820 = vadd.f32 %v456, %v788
        %v821 = vadd.f32 %v459, %v789
        %v822 = vadd.f32 %v464, %v790
        %v823 = vadd.f32 %v467, %v791
        %v824 = vadd.f32 %v472, %v792
        %v825 = vadd.f32 %v475, %v793
        %v826 = vadd.f32 %v480, %v794
        %v827 = vadd.f32 %v483, %v795
        %v828 = vadd.f32 %v488, %v796
        %v829 = vadd.f32 %v491, %v797
        %v830 = vadd.f32 %v496, %v798
        %v831 = vadd.f32 %v499, %v799
        %v832 = vadd.f32 %v504, %v800
        %v833 = vadd.f32 %v507, %v801
        %v834 = vadd.f32 %v512, %v802
        %v835 = vadd.f32 %v515, %v803
        %v836 = vadd.f32 %v520, %v804
        %v837 = vadd.f32 %v523, %v805
        %v838 = vadd.f32 %v528, %v806
        %v839 = vadd.f32 %v531, %v807
        %v840 = vadd.f32 %v536, %v808
        %v841 = vadd.f32 %v539, %v809
        %v842 = vadd.f32 %v544, %v810
        %v843 = vadd.f32 %v547, %v811
        %v844 = vadd.f32 %v552, %v812
        %v845 = vadd.f32 %v555, %v813
        %v846 = vpack.c.bf16 %v815, %v814
        %v847 = vpack.c.bf16 %v817, %v816
        %v848 = vpack.c.bf16 %v819, %v818
        %v849 = vpack.c.bf16 %v821, %v820
        %v850 = vpack.c.bf16 %v823, %v822
        %v851 = vpack.c.bf16 %v825, %v824
        %v852 = vpack.c.bf16 %v827, %v826
        %v853 = vpack.c.bf16 %v829, %v828
        %v854 = vpack.c.bf16 %v831, %v830
        %v855 = vpack.c.bf16 %v833, %v832
        %v856 = vpack.c.bf16 %v835, %v834
        %v857 = vpack.c.bf16 %v837, %v836
        %v858 = vpack.c.bf16 %v839, %v838
        %v859 = vpack.c.bf16 %v841, %v840
        %v860 = vpack.c.bf16 %v843, %v842
        %v861 = vpack.c.bf16 %v845, %v844
        %s862 = scalar_lea.vmem [#allocation4], 64
        %v863 = vld [vmem:[%s862] sm:$0xf]
        %v864 = vld [vmem:[%s862 + $0x4] sm:$0xf]
        %v865 = vld [vmem:[%s862 + $0x8] sm:$0xf]
        %v866 = vld [vmem:[%s862 + $0xc] sm:$0xf]
        %v867 = vld [vmem:[%s862 + $0x10] sm:$0xf]
        %v868 = vld [vmem:[%s862 + $0x14] sm:$0xf]
        %v869 = vld [vmem:[%s862 + $0x18] sm:$0xf]
        %v870 = vld [vmem:[%s862 + $0x1c] sm:$0xf]
        %v871 = vld [vmem:[%s862 + $0x20] sm:$0xf]
        %v872 = vld [vmem:[%s862 + $0x24] sm:$0xf]
        %v873 = vld [vmem:[%s862 + $0x28] sm:$0xf]
        %v874 = vld [vmem:[%s862 + $0x2c] sm:$0xf]
        %v875 = vld [vmem:[%s862 + $0x30] sm:$0xf]
        %v876 = vld [vmem:[%s862 + $0x34] sm:$0xf]
        %v877 = vld [vmem:[%s862 + $0x38] sm:$0xf]
        %v878 = vld [vmem:[%s862 + $0x3c] sm:$0xf]
        %v879 = vld [vmem:[%s2 + $0x1] sm:$0x1]
        %v880 = vlaneseq
        %v881 = vshrl.u32 %v880, 7
        %v882 = vsub.s32 0, %v881
        %v883 = vrot.slane %v879, %v882
        %v900 = vunpack.c.l.b16 %v863
        %v901 = vunpack.c.l.b16 %v864
        %v902 = vunpack.c.l.b16 %v865
        %v903 = vunpack.c.l.b16 %v866
        %v904 = vunpack.c.l.b16 %v867
        %v905 = vunpack.c.l.b16 %v868
        %v906 = vunpack.c.l.b16 %v869
        %v907 = vunpack.c.l.b16 %v870
        %v908 = vunpack.c.l.b16 %v871
        %v909 = vunpack.c.l.b16 %v872
        %v910 = vunpack.c.l.b16 %v873
        %v911 = vunpack.c.l.b16 %v874
        %v912 = vunpack.c.l.b16 %v875
        %v913 = vunpack.c.l.b16 %v876
        %v914 = vunpack.c.l.b16 %v877
        %v915 = vunpack.c.l.b16 %v878
        %v916 = vpack.c.b16 %v901, %v900
        %v917 = vpack.c.b16 %v903, %v902
        %v918 = vpack.c.b16 %v905, %v904
        %v919 = vpack.c.b16 %v907, %v906
        %v920 = vpack.c.b16 %v909, %v908
        %v921 = vpack.c.b16 %v911, %v910
        %v922 = vpack.c.b16 %v913, %v912
        %v923 = vpack.c.b16 %v915, %v914
        %932 = vmatprep.subr.bf16.mxu0 0
        %933 = vmatpush1.bf16.msra.mxu0 %v916
        %934 = vmatprep.subr.bf16.mxu0 0
        %935 = vmatpush1.bf16.msra.mxu0 %v917
        %936 = vmatprep.subr.bf16.mxu0 0
        %937 = vmatpush1.bf16.msra.mxu0 %v918
        %938 = vmatprep.subr.bf16.mxu0 0
        %939 = vmatpush1.bf16.msra.mxu0 %v919
        %940 = vmatprep.subr.bf16.mxu0 0
        %941 = vmatpush1.bf16.msra.mxu0 %v920
        %942 = vmatprep.subr.bf16.mxu0 0
        %943 = vmatpush1.bf16.msra.mxu0 %v921
        %944 = vmatprep.subr.bf16.mxu0 0
        %945 = vmatpush1.bf16.msra.mxu0 %v922
        %946 = vmatprep.subr.bf16.mxu0 0
        %947 = vmatpush1.bf16.msra.mxu0 %v923
        %948 = vmatprep.subr.bf16.mxu0 0
        %949 = vmatpush1.bf16.msra.mxu0 0
        %950 = vmatprep.subr.bf16.mxu0 0
        %951 = vmatpush1.bf16.msra.mxu0 0
        %952 = vmatprep.subr.bf16.mxu0 0
        %953 = vmatpush1.bf16.msra.mxu0 0
        %954 = vmatprep.subr.bf16.mxu0 0
        %955 = vmatpush1.bf16.msra.mxu0 0
        %956 = vmatprep.subr.bf16.mxu0 0
        %957 = vmatpush1.bf16.msra.mxu0 0
        %958 = vmatprep.subr.bf16.mxu0 0
        %959 = vmatpush1.bf16.msra.mxu0 0
        %960 = vmatprep.subr.bf16.mxu0 0
        %961 = vmatpush1.bf16.msra.mxu0 0
        %962 = vmatprep.subr.bf16.mxu0 0
        %963 = vmatpush1.bf16.msra.mxu0 0
        %964 = vmatprep.mubr.bf16.mxu0 0
        %965 = vmatmul.mubr.bf16.gmra.mrb[0].mxu0 %v846
        %v966 = vpop.f32.mrb[0].mxu0
        %v967 = vadd.f32 %v883, %v966
        %v968 = vpop.f32.mrb[0].mxu0
        %v969 = vpop.f32.mrb[0].mxu0
        %v970 = vadd.f32 %v883, %v969
        %v971 = vpop.f32.mrb[0].mxu0
        %972 = vmatprep.mubr.bf16.mxu0 0
        %973 = vmatmul.mubr.bf16.gmra.mrb[0].mxu0 %v847
        %v974 = vpop.f32.mrb[0].mxu0
        %v975 = vadd.f32 %v883, %v974
        %v976 = vpop.f32.mrb[0].mxu0
        %v977 = vpop.f32.mrb[0].mxu0
        %v978 = vadd.f32 %v883, %v977
        %v979 = vpop.f32.mrb[0].mxu0
        %980 = vmatprep.mubr.bf16.mxu0 0
        %981 = vmatmul.mubr.bf16.gmra.mrb[0].mxu0 %v848
        %v982 = vpop.f32.mrb[0].mxu0
        %v983 = vadd.f32 %v883, %v982
        %v984 = vpop.f32.mrb[0].mxu0
        %v985 = vpop.f32.mrb[0].mxu0
        %v986 = vadd.f32 %v883, %v985
        %v987 = vpop.f32.mrb[0].mxu0
        %988 = vmatprep.mubr.bf16.mxu0 0
        %989 = vmatmul.mubr.bf16.gmra.mrb[0].mxu0 %v849
        %v990 = vpop.f32.mrb[0].mxu0
        %v991 = vadd.f32 %v883, %v990
        %v992 = vpop.f32.mrb[0].mxu0
        %v993 = vpop.f32.mrb[0].mxu0
        %v994 = vadd.f32 %v883, %v993
        %v995 = vpop.f32.mrb[0].mxu0
        %996 = vmatprep.mubr.bf16.mxu0 0
        %997 = vmatmul.mubr.bf16.gmra.mrb[0].mxu0 %v850
        %v998 = vpop.f32.mrb[0].mxu0
        %v999 = vadd.f32 %v883, %v998
        %v1000 = vpop.f32.mrb[0].mxu0
        %v1001 = vpop.f32.mrb[0].mxu0
        %v1002 = vadd.f32 %v883, %v1001
        %v1003 = vpop.f32.mrb[0].mxu0
        %1004 = vmatprep.mubr.bf16.mxu0 0
        %1005 = vmatmul.mubr.bf16.gmra.mrb[0].mxu0 %v851
        %v1006 = vpop.f32.mrb[0].mxu0
        %v1007 = vadd.f32 %v883, %v1006
        %v1008 = vpop.f32.mrb[0].mxu0
        %v1009 = vpop.f32.mrb[0].mxu0
        %v1010 = vadd.f32 %v883, %v1009
        %v1011 = vpop.f32.mrb[0].mxu0
        %1012 = vmatprep.mubr.bf16.mxu0 0
        %1013 = vmatmul.mubr.bf16.gmra.mrb[0].mxu0 %v852
        %v1014 = vpop.f32.mrb[0].mxu0
        %v1015 = vadd.f32 %v883, %v1014
        %v1016 = vpop.f32.mrb[0].mxu0
        %v1017 = vpop.f32.mrb[0].mxu0
        %v1018 = vadd.f32 %v883, %v1017
        %v1019 = vpop.f32.mrb[0].mxu0
        %1020 = vmatprep.mubr.bf16.mxu0 0
        %1021 = vmatmul.mubr.bf16.gmra.mrb[0].mxu0 %v853
        %v1022 = vpop.f32.mrb[0].mxu0
        %v1023 = vadd.f32 %v883, %v1022
        %v1024 = vpop.f32.mrb[0].mxu0
        %v1025 = vpop.f32.mrb[0].mxu0
        %v1026 = vadd.f32 %v883, %v1025
        %v1027 = vpop.f32.mrb[0].mxu0
        %1028 = vmatprep.mubr.bf16.mxu0 0
        %1029 = vmatmul.mubr.bf16.gmra.mrb[0].mxu0 %v854
        %v1030 = vpop.f32.mrb[0].mxu0
        %v1031 = vadd.f32 %v883, %v1030
        %v1032 = vpop.f32.mrb[0].mxu0
        %v1033 = vpop.f32.mrb[0].mxu0
        %v1034 = vadd.f32 %v883, %v1033
        %v1035 = vpop.f32.mrb[0].mxu0
        %1036 = vmatprep.mubr.bf16.mxu0 0
        %1037 = vmatmul.mubr.bf16.gmra.mrb[0].mxu0 %v855
        %v1038 = vpop.f32.mrb[0].mxu0
        %v1039 = vadd.f32 %v883, %v1038
        %v1040 = vpop.f32.mrb[0].mxu0
        %v1041 = vpop.f32.mrb[0].mxu0
        %v1042 = vadd.f32 %v883, %v1041
        %v1043 = vpop.f32.mrb[0].mxu0
        %1044 = vmatprep.mubr.bf16.mxu0 0
        %1045 = vmatmul.mubr.bf16.gmra.mrb[0].mxu0 %v856
        %v1046 = vpop.f32.mrb[0].mxu0
        %v1047 = vadd.f32 %v883, %v1046
        %v1048 = vpop.f32.mrb[0].mxu0
        %v1049 = vpop.f32.mrb[0].mxu0
        %v1050 = vadd.f32 %v883, %v1049
        %v1051 = vpop.f32.mrb[0].mxu0
        %1052 = vmatprep.mubr.bf16.mxu0 0
        %1053 = vmatmul.mubr.bf16.gmra.mrb[0].mxu0 %v857
        %v1054 = vpop.f32.mrb[0].mxu0
        %v1055 = vadd.f32 %v883, %v1054
        %v1056 = vpop.f32.mrb[0].mxu0
        %v1057 = vpop.f32.mrb[0].mxu0
        %v1058 = vadd.f32 %v883, %v1057
        %v1059 = vpop.f32.mrb[0].mxu0
        %1060 = vmatprep.mubr.bf16.mxu0 0
        %1061 = vmatmul.mubr.bf16.gmra.mrb[0].mxu0 %v858
        %v1062 = vpop.f32.mrb[0].mxu0
        %v1063 = vadd.f32 %v883, %v1062
        %v1064 = vpop.f32.mrb[0].mxu0
        %v1065 = vpop.f32.mrb[0].mxu0
        %v1066 = vadd.f32 %v883, %v1065
        %v1067 = vpop.f32.mrb[0].mxu0
        %1068 = vmatprep.mubr.bf16.mxu0 0
        %1069 = vmatmul.mubr.bf16.gmra.mrb[0].mxu0 %v859
        %v1070 = vpop.f32.mrb[0].mxu0
        %v1071 = vadd.f32 %v883, %v1070
        %v1072 = vpop.f32.mrb[0].mxu0
        %v1073 = vpop.f32.mrb[0].mxu0
        %v1074 = vadd.f32 %v883, %v1073
        %v1075 = vpop.f32.mrb[0].mxu0
        %1076 = vmatprep.mubr.bf16.mxu0 0
        %1077 = vmatmul.mubr.bf16.gmra.mrb[0].mxu0 %v860
        %v1078 = vpop.f32.mrb[0].mxu0
        %v1079 = vadd.f32 %v883, %v1078
        %v1080 = vpop.f32.mrb[0].mxu0
        %v1081 = vpop.f32.mrb[0].mxu0
        %v1082 = vadd.f32 %v883, %v1081
        %v1083 = vpop.f32.mrb[0].mxu0
        %1084 = vmatprep.mubr.bf16.mxu0 0
        %1085 = vmatmul.mubr.bf16.gmra.mrb[0].mxu0 %v861
        %v1086 = vpop.f32.mrb[0].mxu0
        %v1087 = vadd.f32 %v883, %v1086
        %v1088 = vpop.f32.mrb[0].mxu0
        %v1089 = vpop.f32.mrb[0].mxu0
        %v1090 = vadd.f32 %v883, %v1089
        %v1091 = vpop.f32.mrb[0].mxu0
        %1092 = vdwg.mxu0
        %1093 = vrot.lane.b32.xlu0 %v967, 64
        %v1094 = vpop.permute.xlu0 %1093
        %1095 = vrot.lane.b32.xlu0 %v970, 64
        %v1096 = vpop.permute.xlu0 %1095
        %1097 = vrot.lane.b32.xlu0 %v975, 64
        %v1098 = vpop.permute.xlu0 %1097
        %1099 = vrot.lane.b32.xlu0 %v978, 64
        %v1100 = vpop.permute.xlu0 %1099
        %1101 = vrot.lane.b32.xlu0 %v983, 64
        %v1102 = vpop.permute.xlu0 %1101
        %1103 = vrot.lane.b32.xlu0 %v986, 64
        %v1104 = vpop.permute.xlu0 %1103
        %1105 = vrot.lane.b32.xlu0 %v991, 64
        %v1106 = vpop.permute.xlu0 %1105
        %1107 = vrot.lane.b32.xlu0 %v994, 64
        %v1108 = vpop.permute.xlu0 %1107
        %1109 = vrot.lane.b32.xlu0 %v999, 64
        %v1110 = vpop.permute.xlu0 %1109
        %1111 = vrot.lane.b32.xlu0 %v1002, 64
        %v1112 = vpop.permute.xlu0 %1111
        %1113 = vrot.lane.b32.xlu0 %v1007, 64
        %v1114 = vpop.permute.xlu0 %1113
        %1115 = vrot.lane.b32.xlu0 %v1010, 64
        %v1116 = vpop.permute.xlu0 %1115
        %1117 = vrot.lane.b32.xlu0 %v1015, 64
        %v1118 = vpop.permute.xlu0 %1117
        %1119 = vrot.lane.b32.xlu0 %v1018, 64
        %v1120 = vpop.permute.xlu0 %1119
        %1121 = vrot.lane.b32.xlu0 %v1023, 64
        %v1122 = vpop.permute.xlu0 %1121
        %1123 = vrot.lane.b32.xlu0 %v1026, 64
        %v1124 = vpop.permute.xlu0 %1123
        %1125 = vrot.lane.b32.xlu0 %v1031, 64
        %v1126 = vpop.permute.xlu0 %1125
        %1127 = vrot.lane.b32.xlu0 %v1034, 64
        %v1128 = vpop.permute.xlu0 %1127
        %1129 = vrot.lane.b32.xlu0 %v1039, 64
        %v1130 = vpop.permute.xlu0 %1129
        %1131 = vrot.lane.b32.xlu0 %v1042, 64
        %v1132 = vpop.permute.xlu0 %1131
        %1133 = vrot.lane.b32.xlu0 %v1047, 64
        %v1134 = vpop.permute.xlu0 %1133
        %1135 = vrot.lane.b32.xlu0 %v1050, 64
        %v1136 = vpop.permute.xlu0 %1135
        %1137 = vrot.lane.b32.xlu0 %v1055, 64
        %v1138 = vpop.permute.xlu0 %1137
        %1139 = vrot.lane.b32.xlu0 %v1058, 64
        %v1140 = vpop.permute.xlu0 %1139
        %1141 = vrot.lane.b32.xlu0 %v1063, 64
        %v1142 = vpop.permute.xlu0 %1141
        %1143 = vrot.lane.b32.xlu0 %v1066, 64
        %v1144 = vpop.permute.xlu0 %1143
        %1145 = vrot.lane.b32.xlu0 %v1071, 64
        %v1146 = vpop.permute.xlu0 %1145
        %1147 = vrot.lane.b32.xlu0 %v1074, 64
        %v1148 = vpop.permute.xlu0 %1147
        %1149 = vrot.lane.b32.xlu0 %v1079, 64
        %v1150 = vpop.permute.xlu0 %1149
        %1151 = vrot.lane.b32.xlu0 %v1082, 64
        %v1152 = vpop.permute.xlu0 %1151
        %1153 = vrot.lane.b32.xlu0 %v1087, 64
        %v1154 = vpop.permute.xlu0 %1153
        %1155 = vrot.lane.b32.xlu0 %v1090, 64
        %v1156 = vpop.permute.xlu0 %1155
        %v1157 = vmax.f32 %v1094, -1.0
        %v1158 = vmax.f32 %v1096, -1.0
        %v1159 = vmax.f32 %v1098, -1.0
        %v1160 = vmax.f32 %v1100, -1.0
        %v1161 = vmax.f32 %v1102, -1.0
        %v1162 = vmax.f32 %v1104, -1.0
        %v1163 = vmax.f32 %v1106, -1.0
        %v1164 = vmax.f32 %v1108, -1.0
        %v1165 = vmax.f32 %v1110, -1.0
        %v1166 = vmax.f32 %v1112, -1.0
        %v1167 = vmax.f32 %v1114, -1.0
        %v1168 = vmax.f32 %v1116, -1.0
        %v1169 = vmax.f32 %v1118, -1.0
        %v1170 = vmax.f32 %v1120, -1.0
        %v1171 = vmax.f32 %v1122, -1.0
        %v1172 = vmax.f32 %v1124, -1.0
        %v1173 = vmax.f32 %v1126, -1.0
        %v1174 = vmax.f32 %v1128, -1.0
        %v1175 = vmax.f32 %v1130, -1.0
        %v1176 = vmax.f32 %v1132, -1.0
        %v1177 = vmax.f32 %v1134, -1.0
        %v1178 = vmax.f32 %v1136, -1.0
        %v1179 = vmax.f32 %v1138, -1.0
        %v1180 = vmax.f32 %v1140, -1.0
        %v1181 = vmax.f32 %v1142, -1.0
        %v1182 = vmax.f32 %v1144, -1.0
        %v1183 = vmax.f32 %v1146, -1.0
        %v1184 = vmax.f32 %v1148, -1.0
        %v1185 = vmax.f32 %v1150, -1.0
        %v1186 = vmax.f32 %v1152, -1.0
        %v1187 = vmax.f32 %v1154, -1.0
        %v1188 = vmax.f32 %v1156, -1.0
        %v1189 = vmin.f32 %v1157, 1.0
        %v1190 = vmin.f32 %v1158, 1.0
        %v1191 = vmin.f32 %v1159, 1.0
        %v1192 = vmin.f32 %v1160, 1.0
        %v1193 = vmin.f32 %v1161, 1.0
        %v1194 = vmin.f32 %v1162, 1.0
        %v1195 = vmin.f32 %v1163, 1.0
        %v1196 = vmin.f32 %v1164, 1.0
        %v1197 = vmin.f32 %v1165, 1.0
        %v1198 = vmin.f32 %v1166, 1.0
        %v1199 = vmin.f32 %v1167, 1.0
        %v1200 = vmin.f32 %v1168, 1.0
        %v1201 = vmin.f32 %v1169, 1.0
        %v1202 = vmin.f32 %v1170, 1.0
        %v1203 = vmin.f32 %v1171, 1.0
        %v1204 = vmin.f32 %v1172, 1.0
        %v1205 = vmin.f32 %v1173, 1.0
        %v1206 = vmin.f32 %v1174, 1.0
        %v1207 = vmin.f32 %v1175, 1.0
        %v1208 = vmin.f32 %v1176, 1.0
        %v1209 = vmin.f32 %v1177, 1.0
        %v1210 = vmin.f32 %v1178, 1.0
        %v1211 = vmin.f32 %v1179, 1.0
        %v1212 = vmin.f32 %v1180, 1.0
        %v1213 = vmin.f32 %v1181, 1.0
        %v1214 = vmin.f32 %v1182, 1.0
        %v1215 = vmin.f32 %v1183, 1.0
        %v1216 = vmin.f32 %v1184, 1.0
        %v1217 = vmin.f32 %v1185, 1.0
        %v1218 = vmin.f32 %v1186, 1.0
        %v1219 = vmin.f32 %v1187, 1.0
        %v1220 = vmin.f32 %v1188, 1.0
        %v1221 = vmul.f32 %v1189, 2.0
        %v1222 = vmul.f32 %v1190, 2.0
        %v1223 = vmul.f32 %v1191, 2.0
        %v1224 = vmul.f32 %v1192, 2.0
        %v1225 = vmul.f32 %v1193, 2.0
        %v1226 = vmul.f32 %v1194, 2.0
        %v1227 = vmul.f32 %v1195, 2.0
        %v1228 = vmul.f32 %v1196, 2.0
        %v1229 = vmul.f32 %v1197, 2.0
        %v1230 = vmul.f32 %v1198, 2.0
        %v1231 = vmul.f32 %v1199, 2.0
        %v1232 = vmul.f32 %v1200, 2.0
        %v1233 = vmul.f32 %v1201, 2.0
        %v1234 = vmul.f32 %v1202, 2.0
        %v1235 = vmul.f32 %v1203, 2.0
        %v1236 = vmul.f32 %v1204, 2.0
        %v1237 = vmul.f32 %v1205, 2.0
        %v1238 = vmul.f32 %v1206, 2.0
        %v1239 = vmul.f32 %v1207, 2.0
        %v1240 = vmul.f32 %v1208, 2.0
        %v1241 = vmul.f32 %v1209, 2.0
        %v1242 = vmul.f32 %v1210, 2.0
        %v1243 = vmul.f32 %v1211, 2.0
        %v1244 = vmul.f32 %v1212, 2.0
        %v1245 = vmul.f32 %v1213, 2.0
        %v1246 = vmul.f32 %v1214, 2.0
        %v1247 = vmul.f32 %v1215, 2.0
        %v1248 = vmul.f32 %v1216, 2.0
        %v1249 = vmul.f32 %v1217, 2.0
        %v1250 = vmul.f32 %v1218, 2.0
        %v1251 = vmul.f32 %v1219, 2.0
        %v1252 = vmul.f32 %v1220, 2.0
        %v1253 = vmul.f32 %v1221, %v1189
        %v1254 = vmul.f32 %v1222, %v1190
        %v1255 = vmul.f32 %v1223, %v1191
        %v1256 = vmul.f32 %v1224, %v1192
        %v1257 = vmul.f32 %v1225, %v1193
        %v1258 = vmul.f32 %v1226, %v1194
        %v1259 = vmul.f32 %v1227, %v1195
        %v1260 = vmul.f32 %v1228, %v1196
        %v1261 = vmul.f32 %v1229, %v1197
        %v1262 = vmul.f32 %v1230, %v1198
        %v1263 = vmul.f32 %v1231, %v1199
        %v1264 = vmul.f32 %v1232, %v1200
        %v1265 = vmul.f32 %v1233, %v1201
        %v1266 = vmul.f32 %v1234, %v1202
        %v1267 = vmul.f32 %v1235, %v1203
        %v1268 = vmul.f32 %v1236, %v1204
        %v1269 = vmul.f32 %v1237, %v1205
        %v1270 = vmul.f32 %v1238, %v1206
        %v1271 = vmul.f32 %v1239, %v1207
        %v1272 = vmul.f32 %v1240, %v1208
        %v1273 = vmul.f32 %v1241, %v1209
        %v1274 = vmul.f32 %v1242, %v1210
        %v1275 = vmul.f32 %v1243, %v1211
        %v1276 = vmul.f32 %v1244, %v1212
        %v1277 = vmul.f32 %v1245, %v1213
        %v1278 = vmul.f32 %v1246, %v1214
        %v1279 = vmul.f32 %v1247, %v1215
        %v1280 = vmul.f32 %v1248, %v1216
        %v1281 = vmul.f32 %v1249, %v1217
        %v1282 = vmul.f32 %v1250, %v1218
        %v1283 = vmul.f32 %v1251, %v1219
        %v1284 = vmul.f32 %v1252, %v1220
        %v1285 = vsub.f32 %v1253, 1.0
        %v1286 = vsub.f32 %v1254, 1.0
        %v1287 = vsub.f32 %v1255, 1.0
        %v1288 = vsub.f32 %v1256, 1.0
        %v1289 = vsub.f32 %v1257, 1.0
        %v1290 = vsub.f32 %v1258, 1.0
        %v1291 = vsub.f32 %v1259, 1.0
        %v1292 = vsub.f32 %v1260, 1.0
        %v1293 = vsub.f32 %v1261, 1.0
        %v1294 = vsub.f32 %v1262, 1.0
        %v1295 = vsub.f32 %v1263, 1.0
        %v1296 = vsub.f32 %v1264, 1.0
        %v1297 = vsub.f32 %v1265, 1.0
        %v1298 = vsub.f32 %v1266, 1.0
        %v1299 = vsub.f32 %v1267, 1.0
        %v1300 = vsub.f32 %v1268, 1.0
        %v1301 = vsub.f32 %v1269, 1.0
        %v1302 = vsub.f32 %v1270, 1.0
        %v1303 = vsub.f32 %v1271, 1.0
        %v1304 = vsub.f32 %v1272, 1.0
        %v1305 = vsub.f32 %v1273, 1.0
        %v1306 = vsub.f32 %v1274, 1.0
        %v1307 = vsub.f32 %v1275, 1.0
        %v1308 = vsub.f32 %v1276, 1.0
        %v1309 = vsub.f32 %v1277, 1.0
        %v1310 = vsub.f32 %v1278, 1.0
        %v1311 = vsub.f32 %v1279, 1.0
        %v1312 = vsub.f32 %v1280, 1.0
        %v1313 = vsub.f32 %v1281, 1.0
        %v1314 = vsub.f32 %v1282, 1.0
        %v1315 = vsub.f32 %v1283, 1.0
        %v1316 = vsub.f32 %v1284, 1.0
        %v1317 = vsel %vm311, %v1285, 0.0
        %v1318 = vsel %vm311, %v1286, 0.0
        %v1319 = vsel %vm311, %v1287, 0.0
        %v1320 = vsel %vm311, %v1288, 0.0
        %v1321 = vsel %vm311, %v1289, 0.0
        %v1322 = vsel %vm311, %v1290, 0.0
        %v1323 = vsel %vm311, %v1291, 0.0
        %v1324 = vsel %vm311, %v1292, 0.0
        %v1325 = vsel %vm311, %v1293, 0.0
        %v1326 = vsel %vm311, %v1294, 0.0
        %v1327 = vsel %vm311, %v1295, 0.0
        %v1328 = vsel %vm311, %v1296, 0.0
        %v1329 = vsel %vm311, %v1297, 0.0
        %v1330 = vsel %vm311, %v1298, 0.0
        %v1331 = vsel %vm311, %v1299, 0.0
        %v1332 = vsel %vm311, %v1300, 0.0
        %v1333 = vsel %vm311, %v1301, 0.0
        %v1334 = vsel %vm311, %v1302, 0.0
        %v1335 = vsel %vm311, %v1303, 0.0
        %v1336 = vsel %vm311, %v1304, 0.0
        %v1337 = vsel %vm311, %v1305, 0.0
        %v1338 = vsel %vm311, %v1306, 0.0
        %v1339 = vsel %vm311, %v1307, 0.0
        %v1340 = vsel %vm311, %v1308, 0.0
        %v1341 = vsel %vm311, %v1309, 0.0
        %v1342 = vsel %vm311, %v1310, 0.0
        %v1343 = vsel %vm311, %v1311, 0.0
        %v1344 = vsel %vm311, %v1312, 0.0
        %v1345 = vsel %vm311, %v1313, 0.0
        %v1346 = vsel %vm311, %v1314, 0.0
        %v1347 = vsel %vm311, %v1315, 0.0
        %v1348 = vsel %vm311, %v1316, 0.0
        %v1349 = vadd.f32 %v967, %v1317
        %v1350 = vadd.f32 %v970, %v1318
        %v1351 = vadd.f32 %v975, %v1319
        %v1352 = vadd.f32 %v978, %v1320
        %v1353 = vadd.f32 %v983, %v1321
        %v1354 = vadd.f32 %v986, %v1322
        %v1355 = vadd.f32 %v991, %v1323
        %v1356 = vadd.f32 %v994, %v1324
        %v1357 = vadd.f32 %v999, %v1325
        %v1358 = vadd.f32 %v1002, %v1326
        %v1359 = vadd.f32 %v1007, %v1327
        %v1360 = vadd.f32 %v1010, %v1328
        %v1361 = vadd.f32 %v1015, %v1329
        %v1362 = vadd.f32 %v1018, %v1330
        %v1363 = vadd.f32 %v1023, %v1331
        %v1364 = vadd.f32 %v1026, %v1332
        %v1365 = vadd.f32 %v1031, %v1333
        %v1366 = vadd.f32 %v1034, %v1334
        %v1367 = vadd.f32 %v1039, %v1335
        %v1368 = vadd.f32 %v1042, %v1336
        %v1369 = vadd.f32 %v1047, %v1337
        %v1370 = vadd.f32 %v1050, %v1338
        %v1371 = vadd.f32 %v1055, %v1339
        %v1372 = vadd.f32 %v1058, %v1340
        %v1373 = vadd.f32 %v1063, %v1341
        %v1374 = vadd.f32 %v1066, %v1342
        %v1375 = vadd.f32 %v1071, %v1343
        %v1376 = vadd.f32 %v1074, %v1344
        %v1377 = vadd.f32 %v1079, %v1345
        %v1378 = vadd.f32 %v1082, %v1346
        %v1379 = vadd.f32 %v1087, %v1347
        %v1380 = vadd.f32 %v1090, %v1348
        %v1381 = vpack.c.bf16 %v1350, %v1349
        %v1382 = vpack.c.bf16 %v1352, %v1351
        %v1383 = vpack.c.bf16 %v1354, %v1353
        %v1384 = vpack.c.bf16 %v1356, %v1355
        %v1385 = vpack.c.bf16 %v1358, %v1357
        %v1386 = vpack.c.bf16 %v1360, %v1359
        %v1387 = vpack.c.bf16 %v1362, %v1361
        %v1388 = vpack.c.bf16 %v1364, %v1363
        %v1389 = vpack.c.bf16 %v1366, %v1365
        %v1390 = vpack.c.bf16 %v1368, %v1367
        %v1391 = vpack.c.bf16 %v1370, %v1369
        %v1392 = vpack.c.bf16 %v1372, %v1371
        %v1393 = vpack.c.bf16 %v1374, %v1373
        %v1394 = vpack.c.bf16 %v1376, %v1375
        %v1395 = vpack.c.bf16 %v1378, %v1377
        %v1396 = vpack.c.bf16 %v1380, %v1379
        %v1397 = vld [vmem:[#allocation6] sm:$0xf]
        %v1398 = vld [vmem:[#allocation6 + $0x4] sm:$0xf]
        %v1399 = vld [vmem:[#allocation6 + $0x8] sm:$0xf]
        %v1400 = vld [vmem:[#allocation6 + $0xc] sm:$0xf]
        %v1401 = vld [vmem:[#allocation6 + $0x10] sm:$0xf]
        %v1402 = vld [vmem:[#allocation6 + $0x14] sm:$0xf]
        %v1403 = vld [vmem:[#allocation6 + $0x18] sm:$0xf]
        %v1404 = vld [vmem:[#allocation6 + $0x1c] sm:$0xf]
        %v1405 = vld [vmem:[#allocation6 + $0x20] sm:$0xf]
        %v1406 = vld [vmem:[#allocation6 + $0x24] sm:$0xf]
        %v1407 = vld [vmem:[#allocation6 + $0x28] sm:$0xf]
        %v1408 = vld [vmem:[#allocation6 + $0x2c] sm:$0xf]
        %v1409 = vld [vmem:[#allocation6 + $0x30] sm:$0xf]
        %v1410 = vld [vmem:[#allocation6 + $0x34] sm:$0xf]
        %v1411 = vld [vmem:[#allocation6 + $0x38] sm:$0xf]
        %v1412 = vld [vmem:[#allocation6 + $0x3c] sm:$0xf]
        %v1413 = vld [vmem:[%s4] sm:$0x1]
        %v1415 = vlaneseq
        %v1416 = vshrl.u32 %v1415, 7
        %v1417 = vsub.s32 0, %v1416
        %v1418 = vrot.slane %v1413, %v1417
        %v1436 = vunpack.c.l.b16 %v1397
        %v1437 = vunpack.c.l.b16 %v1398
        %v1438 = vunpack.c.l.b16 %v1399
        %v1439 = vunpack.c.l.b16 %v1400
        %v1440 = vunpack.c.l.b16 %v1401
        %v1441 = vunpack.c.l.b16 %v1402
        %v1442 = vunpack.c.l.b16 %v1403
        %v1443 = vunpack.c.l.b16 %v1404
        %v1444 = vunpack.c.l.b16 %v1405
        %v1445 = vunpack.c.l.b16 %v1406
        %v1446 = vunpack.c.l.b16 %v1407
        %v1447 = vunpack.c.l.b16 %v1408
        %v1448 = vunpack.c.l.b16 %v1409
        %v1449 = vunpack.c.l.b16 %v1410
        %v1450 = vunpack.c.l.b16 %v1411
        %v1451 = vunpack.c.l.b16 %v1412
        %v1452 = vpack.c.b16 %v1437, %v1436
        %v1453 = vpack.c.b16 %v1439, %v1438
        %v1454 = vpack.c.b16 %v1441, %v1440
        %v1455 = vpack.c.b16 %v1443, %v1442
        %v1456 = vpack.c.b16 %v1445, %v1444
        %v1457 = vpack.c.b16 %v1447, %v1446
        %v1458 = vpack.c.b16 %v1449, %v1448
        %v1459 = vpack.c.b16 %v1451, %v1450
        %1468 = vmatprep.subr.bf16.mxu0 0
        %1469 = vmatpush1.bf16.msra.mxu0 %v1452
        %1470 = vmatprep.subr.bf16.mxu0 0
        %1471 = vmatpush1.bf16.msra.mxu0 %v1453
        %1472 = vmatprep.subr.bf16.mxu0 0
        %1473 = vmatpush1.bf16.msra.mxu0 %v1454
        %1474 = vmatprep.subr.bf16.mxu0 0
        %1475 = vmatpush1.bf16.msra.mxu0 %v1455
        %1476 = vmatprep.subr.bf16.mxu0 0
        %1477 = vmatpush1.bf16.msra.mxu0 %v1456
        %1478 = vmatprep.subr.bf16.mxu0 0
        %1479 = vmatpush1.bf16.msra.mxu0 %v1457
        %1480 = vmatprep.subr.bf16.mxu0 0
        %1481 = vmatpush1.bf16.msra.mxu0 %v1458
        %1482 = vmatprep.subr.bf16.mxu0 0
        %1483 = vmatpush1.bf16.msra.mxu0 %v1459
        %1484 = vmatprep.subr.bf16.mxu0 0
        %1485 = vmatpush1.bf16.msra.mxu0 0
        %1486 = vmatprep.subr.bf16.mxu0 0
        %1487 = vmatpush1.bf16.msra.mxu0 0
        %1488 = vmatprep.subr.bf16.mxu0 0
        %1489 = vmatpush1.bf16.msra.mxu0 0
        %1490 = vmatprep.subr.bf16.mxu0 0
        %1491 = vmatpush1.bf16.msra.mxu0 0
        %1492 = vmatprep.subr.bf16.mxu0 0
        %1493 = vmatpush1.bf16.msra.mxu0 0
        %1494 = vmatprep.subr.bf16.mxu0 0
        %1495 = vmatpush1.bf16.msra.mxu0 0
        %1496 = vmatprep.subr.bf16.mxu0 0
        %1497 = vmatpush1.bf16.msra.mxu0 0
        %1498 = vmatprep.subr.bf16.mxu0 0
        %1499 = vmatpush1.bf16.msra.mxu0 0
        %1500 = vmatprep.mubr.bf16.mxu0 0
        %1501 = vmatmul.mubr.bf16.gmra.mrb[0].mxu0 %v1381
        %v1502 = vpop.f32.mrb[0].mxu0
        %v1503 = vadd.f32 %v1418, %v1502
        %v1504 = vpop.f32.mrb[0].mxu0
        %v1505 = vpop.f32.mrb[0].mxu0
        %v1506 = vadd.f32 %v1418, %v1505
        %v1507 = vpop.f32.mrb[0].mxu0
        %1508 = vmatprep.mubr.bf16.mxu0 0
        %1509 = vmatmul.mubr.bf16.gmra.mrb[0].mxu0 %v1382
        %v1510 = vpop.f32.mrb[0].mxu0
        %v1511 = vadd.f32 %v1418, %v1510
        %v1512 = vpop.f32.mrb[0].mxu0
        %v1513 = vpop.f32.mrb[0].mxu0
        %v1514 = vadd.f32 %v1418, %v1513
        %v1515 = vpop.f32.mrb[0].mxu0
        %1516 = vmatprep.mubr.bf16.mxu0 0
        %1517 = vmatmul.mubr.bf16.gmra.mrb[0].mxu0 %v1383
        %v1518 = vpop.f32.mrb[0].mxu0
        %v1519 = vadd.f32 %v1418, %v1518
        %v1520 = vpop.f32.mrb[0].mxu0
        %v1521 = vpop.f32.mrb[0].mxu0
        %v1522 = vadd.f32 %v1418, %v1521
        %v1523 = vpop.f32.mrb[0].mxu0
        %1524 = vmatprep.mubr.bf16.mxu0 0
        %1525 = vmatmul.mubr.bf16.gmra.mrb[0].mxu0 %v1384
        %v1526 = vpop.f32.mrb[0].mxu0
        %v1527 = vadd.f32 %v1418, %v1526
        %v1528 = vpop.f32.mrb[0].mxu0
        %v1529 = vpop.f32.mrb[0].mxu0
        %v1530 = vadd.f32 %v1418, %v1529
        %v1531 = vpop.f32.mrb[0].mxu0
        %1532 = vmatprep.mubr.bf16.mxu0 0
        %1533 = vmatmul.mubr.bf16.gmra.mrb[0].mxu0 %v1385
        %v1534 = vpop.f32.mrb[0].mxu0
        %v1535 = vadd.f32 %v1418, %v1534
        %v1536 = vpop.f32.mrb[0].mxu0
        %v1537 = vpop.f32.mrb[0].mxu0
        %v1538 = vadd.f32 %v1418, %v1537
        %v1539 = vpop.f32.mrb[0].mxu0
        %1540 = vmatprep.mubr.bf16.mxu0 0
        %1541 = vmatmul.mubr.bf16.gmra.mrb[0].mxu0 %v1386
        %v1542 = vpop.f32.mrb[0].mxu0
        %v1543 = vadd.f32 %v1418, %v1542
        %v1544 = vpop.f32.mrb[0].mxu0
        %v1545 = vpop.f32.mrb[0].mxu0
        %v1546 = vadd.f32 %v1418, %v1545
        %v1547 = vpop.f32.mrb[0].mxu0
        %1548 = vmatprep.mubr.bf16.mxu0 0
        %1549 = vmatmul.mubr.bf16.gmra.mrb[0].mxu0 %v1387
        %v1550 = vpop.f32.mrb[0].mxu0
        %v1551 = vadd.f32 %v1418, %v1550
        %v1552 = vpop.f32.mrb[0].mxu0
        %v1553 = vpop.f32.mrb[0].mxu0
        %v1554 = vadd.f32 %v1418, %v1553
        %v1555 = vpop.f32.mrb[0].mxu0
        %1556 = vmatprep.mubr.bf16.mxu0 0
        %1557 = vmatmul.mubr.bf16.gmra.mrb[0].mxu0 %v1388
        %v1558 = vpop.f32.mrb[0].mxu0
        %v1559 = vadd.f32 %v1418, %v1558
        %v1560 = vpop.f32.mrb[0].mxu0
        %v1561 = vpop.f32.mrb[0].mxu0
        %v1562 = vadd.f32 %v1418, %v1561
        %v1563 = vpop.f32.mrb[0].mxu0
        %1564 = vmatprep.mubr.bf16.mxu0 0
        %1565 = vmatmul.mubr.bf16.gmra.mrb[0].mxu0 %v1389
        %v1566 = vpop.f32.mrb[0].mxu0
        %v1567 = vadd.f32 %v1418, %v1566
        %v1568 = vpop.f32.mrb[0].mxu0
        %v1569 = vpop.f32.mrb[0].mxu0
        %v1570 = vadd.f32 %v1418, %v1569
        %v1571 = vpop.f32.mrb[0].mxu0
        %1572 = vmatprep.mubr.bf16.mxu0 0
        %1573 = vmatmul.mubr.bf16.gmra.mrb[0].mxu0 %v1390
        %v1574 = vpop.f32.mrb[0].mxu0
        %v1575 = vadd.f32 %v1418, %v1574
        %v1576 = vpop.f32.mrb[0].mxu0
        %v1577 = vpop.f32.mrb[0].mxu0
        %v1578 = vadd.f32 %v1418, %v1577
        %v1579 = vpop.f32.mrb[0].mxu0
        %1580 = vmatprep.mubr.bf16.mxu0 0
        %1581 = vmatmul.mubr.bf16.gmra.mrb[0].mxu0 %v1391
        %v1582 = vpop.f32.mrb[0].mxu0
        %v1583 = vadd.f32 %v1418, %v1582
        %v1584 = vpop.f32.mrb[0].mxu0
        %v1585 = vpop.f32.mrb[0].mxu0
        %v1586 = vadd.f32 %v1418, %v1585
        %v1587 = vpop.f32.mrb[0].mxu0
        %1588 = vmatprep.mubr.bf16.mxu0 0
        %1589 = vmatmul.mubr.bf16.gmra.mrb[0].mxu0 %v1392
        %v1590 = vpop.f32.mrb[0].mxu0
        %v1591 = vadd.f32 %v1418, %v1590
        %v1592 = vpop.f32.mrb[0].mxu0
        %v1593 = vpop.f32.mrb[0].mxu0
        %v1594 = vadd.f32 %v1418, %v1593
        %v1595 = vpop.f32.mrb[0].mxu0
        %1596 = vmatprep.mubr.bf16.mxu0 0
        %1597 = vmatmul.mubr.bf16.gmra.mrb[0].mxu0 %v1393
        %v1598 = vpop.f32.mrb[0].mxu0
        %v1599 = vadd.f32 %v1418, %v1598
        %v1600 = vpop.f32.mrb[0].mxu0
        %v1601 = vpop.f32.mrb[0].mxu0
        %v1602 = vadd.f32 %v1418, %v1601
        %v1603 = vpop.f32.mrb[0].mxu0
        %1604 = vmatprep.mubr.bf16.mxu0 0
        %1605 = vmatmul.mubr.bf16.gmra.mrb[0].mxu0 %v1394
        %v1606 = vpop.f32.mrb[0].mxu0
        %v1607 = vadd.f32 %v1418, %v1606
        %v1608 = vpop.f32.mrb[0].mxu0
        %v1609 = vpop.f32.mrb[0].mxu0
        %v1610 = vadd.f32 %v1418, %v1609
        %v1611 = vpop.f32.mrb[0].mxu0
        %1612 = vmatprep.mubr.bf16.mxu0 0
        %1613 = vmatmul.mubr.bf16.gmra.mrb[0].mxu0 %v1395
        %v1614 = vpop.f32.mrb[0].mxu0
        %v1615 = vadd.f32 %v1418, %v1614
        %v1616 = vpop.f32.mrb[0].mxu0
        %v1617 = vpop.f32.mrb[0].mxu0
        %v1618 = vadd.f32 %v1418, %v1617
        %v1619 = vpop.f32.mrb[0].mxu0
        %1620 = vmatprep.mubr.bf16.mxu0 0
        %1621 = vmatmul.mubr.bf16.gmra.mrb[0].mxu0 %v1396
        %v1622 = vpop.f32.mrb[0].mxu0
        %v1623 = vadd.f32 %v1418, %v1622
        %v1624 = vpop.f32.mrb[0].mxu0
        %v1625 = vpop.f32.mrb[0].mxu0
        %v1626 = vadd.f32 %v1418, %v1625
        %v1627 = vpop.f32.mrb[0].mxu0
        %1628 = vdwg.mxu0
        %1629 = vst [vmem:[%s274] sm:$0xff] %v1503
        %1630 = vst [vmem:[%s274 + $0x8] sm:$0xff] %v1506
        %1631 = vst [vmem:[%s274 + $0x10] sm:$0xff] %v1511
        %1632 = vst [vmem:[%s274 + $0x18] sm:$0xff] %v1514
        %1633 = vst [vmem:[%s274 + $0x20] sm:$0xff] %v1519
        %1634 = vst [vmem:[%s274 + $0x28] sm:$0xff] %v1522
        %1635 = vst [vmem:[%s274 + $0x30] sm:$0xff] %v1527
        %1636 = vst [vmem:[%s274 + $0x38] sm:$0xff] %v1530
        %1637 = vst [vmem:[%s274 + $0x40] sm:$0xff] %v1535
        %1638 = vst [vmem:[%s274 + $0x48] sm:$0xff] %v1538
        %1639 = vst [vmem:[%s274 + $0x50] sm:$0xff] %v1543
        %1640 = vst [vmem:[%s274 + $0x58] sm:$0xff] %v1546
        %1641 = vst [vmem:[%s274 + $0x60] sm:$0xff] %v1551
        %1642 = vst [vmem:[%s274 + $0x68] sm:$0xff] %v1554
        %1643 = vst [vmem:[%s274 + $0x70] sm:$0xff] %v1559
        %1644 = vst [vmem:[%s274 + $0x78] sm:$0xff] %v1562
        %1645 = vst [vmem:[%s274 + $0x80] sm:$0xff] %v1567
        %1646 = vst [vmem:[%s274 + $0x88] sm:$0xff] %v1570
        %1647 = vst [vmem:[%s274 + $0x90] sm:$0xff] %v1575
        %1648 = vst [vmem:[%s274 + $0x98] sm:$0xff] %v1578
        %1649 = vst [vmem:[%s274 + $0xa0] sm:$0xff] %v1583
        %1650 = vst [vmem:[%s274 + $0xa8] sm:$0xff] %v1586
        %1651 = vst [vmem:[%s274 + $0xb0] sm:$0xff] %v1591
        %1652 = vst [vmem:[%s274 + $0xb8] sm:$0xff] %v1594
        %1653 = vst [vmem:[%s274 + $0xc0] sm:$0xff] %v1599
        %1654 = vst [vmem:[%s274 + $0xc8] sm:$0xff] %v1602
        %1655 = vst [vmem:[%s274 + $0xd0] sm:$0xff] %v1607
        %1656 = vst [vmem:[%s274 + $0xd8] sm:$0xff] %v1610
        %1657 = vst [vmem:[%s274 + $0xe0] sm:$0xff] %v1615
        %1658 = vst [vmem:[%s274 + $0xe8] sm:$0xff] %v1618
        %1659 = vst [vmem:[%s274 + $0xf0] sm:$0xff] %v1623
        %1660 = vst [vmem:[%s274 + $0xf8] sm:$0xff] %v1626
        %s1661 = smul.u32 32, %s20
        %p1662 = scmp.lt.s32.totalorder %s1661, 63
        %s1663 = scalar_select %p1662, %s1661, 63
        %s1664 = smul.addr %s1663, 8
        %s1665 = scalar_lea.vmem %s5, %s1664
        // Predicated region
        $region53: #{vpnn_forward.1} parent=39 // pred_check
          %p1666 = pneg %p148
        $region54: #{vpnn_forward.1} parent=39 // pred_check_branch
          %1668 = sbr.rel (%p1666) target = $region56
        $region55: #{vpnn_forward.1} parent=39 // pred_region
          %s1669 = smul.u32 32, %s20
        $region56: #{vpnn_forward.1} parent=39 // pred_fallthru
          _
      $region40: #{vpnn_forward.1} parent=5 // pred_fallthru
        _
      %p1670 = scmp.le.s32.totalorder 2, %s15
      // Predicated region
      $region57: #{vpnn_forward.1} parent=5 // pred_check
        %p1671 = pneg %p1670
      $region58: #{vpnn_forward.1} parent=5 // pred_check_branch
        %1673 = sbr.rel (%p1671) target = $region60
      $region59: #{vpnn_forward.1} parent=5 // pred_region
        %s1674 = ssub.s32 %s15, 2
        // Predicated region
        $region61: #{vpnn_forward.1} parent=59 // pred_check
          %p1675 = pneg %p154
        $region62: #{vpnn_forward.1} parent=59 // pred_check_branch
          %1677 = sbr.rel (%p1675) target = $region64
        $region63: #{vpnn_forward.1} parent=59 // pred_region
          %s1678 = smul.u32 32, %s21
          %p1679 = scmp.lt.s32.totalorder %s1678, 63
          %s1680 = scalar_select %p1679, %s1678, 63
          %s1681 = smul.addr %s1680, 8
          %s1682 = scalar_lea.vmem %s5, %s1681
        $region64: #{vpnn_forward.1} parent=59 // pred_fallthru
          _
      $region60: #{vpnn_forward.1} parent=5 // pred_fallthru
        _
    $region6: #{vpnn_forward.1} parent=1 // loop_footer
      %s19 = sadd.s32 1, %s15
    $region7: #{vpnn_forward.1} parent=1 // loop_footer_branch
      %14 = sbr.rel target = $region3
    $region8: #{vpnn_forward.1} parent=1 // loop_exit
      _
    %1683 = vsyncpa [#allocation3], 1
    %s1684 = scalar_lea.sflag [#allocation3], 1
    %1685 = vsyncpa %s1684, 1
    %1686 = vsyncpa [#allocation5], 1

</llo_original>
